<compile_context>
chip_gen: v7x
topology: tpu7x:2x2x1
jax: 0.10.0
libtpu: 0.0.40
codegen_flags: <defaults>
</compile_context>

<pallas_src>
import functools
import math

import jax
import jax.numpy as jnp
from jax import lax
from jax.experimental import pallas as pl
from jax.experimental.pallas import tpu as pltpu


def _round_up(x, m):
    return (x + m - 1) // m * m


def _head_grouping(num_heads, head_dim):
    """Process heads in groups whose combined lane width targets 128
    (e.g. head_dim=64 -> 2 heads/group) so group-level work is lane-dense."""
    hpg = min(num_heads, max(1, 128 // head_dim))
    while num_heads % hpg:
        hpg -= 1
    return hpg, num_heads // hpg


def _pick_block_b(batch, seq_len, rows_target=256):
    """Batch rows per grid step: push matmul M toward rows_target (256 fills
    the v6e/v7x 256-wide MXU; harmless on v5e), keep >=2 parallel grid steps
    so v7x's two TensorCores both get work, and keep per-batch row offsets
    sublane (8)-aligned."""
    # TODO(synk): parameterize rows_target by generation (128 on v5e) via
    # pltpu.get_tpu_info() chip-version probing.
    if seq_len % 8 != 0:
        return 1
    target = max(1, rows_target // seq_len)
    best = 1
    for d in range(1, batch + 1):
        if batch % d == 0 and d <= target:
            best = d
    while best > 1 and batch // best < 2:
        best -= 1
        while batch % best:
            best -= 1
    return best


def _vmem_limit_bytes(block_b, seq_len, C, Cp):
    """Explicit scoped-VMEM request (defaults: 16 MiB v5e / 32 MiB v6e,v7x);
    clamped safely below v7x's 64 MiB physical VMEM."""
    rows = block_b * seq_len
    need = 0
    need += 2 * rows * C * 2            # x block (bf16), double-buffered
    need += 2 * C * 3 * C * 2           # qkv weights (bf16), double-buffered
    need += 2 * C * Cp * 2              # proj weights (bf16), double-buffered
    need += 2 * Cp * 4                  # bias (f32)
    need += 2 * rows * Cp * 4           # output block (f32), double-buffered
    need += rows * 3 * C * 2            # in-kernel qkv slab (bf16)
    need += 4 * seq_len * seq_len * 4   # score / prob temporaries (f32)
    need += rows * Cp * 4               # projection partial sums (f32)
    return int(min(max(need * 3 // 2, 16 * 1024 * 1024), 50 * 1024 * 1024))


def _attention_kernel(x_ref, wqkv_ref, wproj_ref, bproj_ref, o_ref, *,
                      heads_per_group, num_groups, head_dim, block_b, seq_len):
    hpg, G, Dh, BT, N = heads_per_group, num_groups, head_dim, block_b, seq_len
    gw = hpg * Dh
    C = G * gw

    x = x_ref[...].reshape(BT * N, C)                       # (BT*N, C) bf16

    # One fat QKV projection (widest, most MXU-efficient matmul). The qk scale
    # is already folded into the Q weight columns, so the f32 accumulation is
    # cast straight to bf16 (halves the live qkv slab vs f32).
    qkv = jnp.dot(x, wqkv_ref[...],
                  preferred_element_type=jnp.float32).astype(jnp.bfloat16)

    nt = (((1,), (1,)), ((), ()))                           # q @ k^T, no .T

    # TODO(synk): for long-sequence / v7x (64 MiB VMEM) shapes, switch to a
    # query-tiled online-softmax (flash) accumulator; the per-head (N, N)
    # score tile here assumes ViT-scale N.
    for b in range(BT):                                     # BT == 1 for ViT-scale N
        qb = qkv[b * N:(b + 1) * N]                         # (N, 3C); 8-aligned rows
        for g in range(G):
            # Temporaries of a head group die at the o_ref write below, which
            # keeps live ranges (vreg/VMEM pressure) bounded per group.
            pv_parts = []
            for h in range(hpg):
                off = g * gw + h * Dh
                q = qb[:, off:off + Dh]                     # (N, Dh) bf16 (scaled)
                k = qb[:, C + off:C + off + Dh]
                v = qb[:, 2 * C + off:2 * C + off + Dh]

                # Scores: NT matmul on the MXU.
                s = lax.dot_general(q, k, nt,
                                    preferred_element_type=jnp.float32)  # (N, N)

                # Numerically-stable softmax in f32; approx reciprocal on the
                # EUP (~2^-12 rel err — intentional precision trade).
                # TODO(synk): on v6e/v7x the exp could run in bf16 on the EUP
                # (~2x); kept f32 since v5e has no bf16 EUP path.
                m = jnp.max(s, axis=-1, keepdims=True)
                e = jnp.exp(s - m)
                p = (e * pl.reciprocal(jnp.sum(e, axis=-1, keepdims=True),
                                       approx=True)).astype(jnp.bfloat16)
                # attn_drop has p=0.0 -> identity.
                pv_parts.append(
                    jnp.dot(p, v, preferred_element_type=jnp.float32)
                    .astype(jnp.bfloat16))                  # (N, Dh)

            # Lane-dense group output (gw == 128 for standard ViT heads).
            pv = pv_parts[0] if hpg == 1 else jnp.concatenate(pv_parts, axis=-1)

            # Accumulate this group's slice of the output projection directly
            # into the resident output block: no ctx scratch slab, no masked
            # 64-lane stores — every o_ref store is full-width lane-dense.
            contrib = jnp.dot(pv, wproj_ref[g * gw:(g + 1) * gw, :],
                              preferred_element_type=jnp.float32)   # (N, Cp)
            if g == 0:
                # Bias added once; proj_drop has p=0.0 -> identity.
                o_ref[b] = (contrib + bproj_ref[...]).astype(o_ref.dtype)
            else:
                o_ref[b] = (o_ref[b] + contrib).astype(o_ref.dtype)


def prepare_attention_params(w_qkv, w_proj, b_proj, num_heads, qk_scale=None):
    """One-time parameter prep (hoisted off the forward path): fold the qk
    scale into the Q weight columns, transpose torch Linear weights to x@W
    layout, cast MXU operands to bf16, pad the output projection to a
    128-lane multiple."""
    three_c, C = w_qkv.shape
    assert three_c == 3 * C and C % num_heads == 0
    head_dim = C // num_heads
    scale = qk_scale if qk_scale is not None else head_dim ** (-0.5)
    Cp = _round_up(C, 128)

    w = jnp.asarray(w_qkv, jnp.float32).reshape(3, C, C)
    w = w.at[0].multiply(scale)                               # fold scale into Q
    wqkv_t = w.reshape(3 * C, C).T.astype(jnp.bfloat16)       # (C, 3C)

    wproj_t = jnp.asarray(w_proj, jnp.float32).T              # (C, C)
    wproj_t = jnp.pad(wproj_t, ((0, 0), (0, Cp - C))).astype(jnp.bfloat16)  # (C, Cp)
    bproj2d = jnp.pad(jnp.asarray(b_proj, jnp.float32).reshape(1, C),
                      ((0, 0), (0, Cp - C)))                  # (1, Cp)
    return wqkv_t, wproj_t, bproj2d


def attention_forward(x, wqkv_t, wproj_t, bproj2d, num_heads, *, block_b=None):
    """x: (B, N, C) f32/bf16. wqkv_t: (C, 3C) bf16 (scale folded into Q cols).
       wproj_t: (C, Cp) bf16. bproj2d: (1, Cp) f32. Returns (B, N, C) f32."""
    B, N, C = x.shape
    assert C % num_heads == 0
    head_dim = C // num_heads
    hpg, G = _head_grouping(num_heads, head_dim)
    Cp = wproj_t.shape[1]

    if block_b is None:
        block_b = _pick_block_b(B, N)
    assert B % block_b == 0

    kernel = functools.partial(
        _attention_kernel, heads_per_group=hpg, num_groups=G,
        head_dim=head_dim, block_b=block_b, seq_len=N)

    out_padded = pl.pallas_call(
        kernel,
        out_shape=jax.ShapeDtypeStruct((B, N, Cp), jnp.float32),
        grid=(B // block_b,),
        in_specs=[
            pl.BlockSpec((block_b, N, C), lambda i: (i, 0, 0)),
            pl.BlockSpec((C, 3 * C), lambda i: (0, 0)),   # grid-invariant, resident
            pl.BlockSpec((C, Cp), lambda i: (0, 0)),      # grid-invariant, resident
            pl.BlockSpec((1, Cp), lambda i: (0, 0)),
        ],
        out_specs=pl.BlockSpec((block_b, N, Cp), lambda i: (i, 0, 0)),
        compiler_params=pltpu.CompilerParams(
            dimension_semantics=("parallel",),
            vmem_limit_bytes=_vmem_limit_bytes(block_b, N, C, Cp)),
    )(x.astype(jnp.bfloat16), wqkv_t, wproj_t, bproj2d)

    return out_padded[..., :C] if Cp != C else out_padded


def attention_reference(x, w_qkv, w_proj, b_proj, num_heads):
    """Pure-JAX f32 reproduction of the PyTorch forward, for validation."""
    B, N, C = x.shape
    head_dim = C // num_heads
    scale = head_dim ** (-0.5)
    qkv = jnp.einsum("bnc,dc->bnd", x, w_qkv)            # (B, N, 3C), no bias
    qkv = qkv.reshape(B, N, 3, num_heads, head_dim).transpose(2, 0, 3, 1, 4)
    q, k, v = qkv[0], qkv[1], qkv[2]                     # (B, H, N, Dh)
    attn = jnp.einsum("bhnd,bhmd->bhnm", q, k) * scale
    attn = jax.nn.softmax(attn, axis=-1)
    out = jnp.einsum("bhnm,bhmd->bhnd", attn, v)         # (B, H, N, Dh)
    out = out.transpose(0, 2, 1, 3).reshape(B, N, C)
    return jnp.einsum("bnc,dc->bnd", out, w_proj) + b_proj


if __name__ == "__main__":
    B, N, C = 2, 16, 64
    num_heads = 8

    key = jax.random.PRNGKey(0)
    kx, kqkv, kproj, kb = jax.random.split(key, 4)

    x = jax.random.normal(kx, (B, N, C), dtype=jnp.float32)

    # Deterministic parameter init (nn.Linear shapes; qkv_bias=False).
    bound = 1.0 / math.sqrt(C)
    w_qkv = jax.random.uniform(kqkv, (3 * C, C), jnp.float32, -bound, bound)
    w_proj = jax.random.uniform(kproj, (C, C), jnp.float32, -bound, bound)
    b_proj = jax.random.uniform(kb, (C,), jnp.float32, -bound, bound)

    params = prepare_attention_params(w_qkv, w_proj, b_proj, num_heads)
    out = attention_forward(x, *params, num_heads=num_heads)
    out = jax.block_until_ready(out)

    ref = attention_reference(x, w_qkv, w_proj, b_proj, num_heads)
    assert out.shape == (B, N, C)
    max_err = float(jnp.max(jnp.abs(out - ref)))
    # bf16 MXU operands + EUP approx reciprocal vs an f32 reference.
    assert jnp.allclose(out, ref, rtol=3e-2, atol=3e-2), (
        f"mismatch vs reference (max abs err {max_err})")

    print("KERNEL_OK")
</pallas_src>

<mosaic_0001>
module attributes {stable_mosaic.version = 11 : i64} {
  func.func @_attention_kernel(%arg0: i32, %arg1: memref<1x16x64xbf16, #tpu.memory_space<vmem>>, %arg2: memref<64x192xbf16, #tpu.memory_space<vmem>>, %arg3: memref<64x128xbf16, #tpu.memory_space<vmem>>, %arg4: memref<1x128xf32, #tpu.memory_space<vmem>>, %arg5: memref<1x16x128xf32, #tpu.memory_space<vmem>>) attributes {dimension_semantics = [#tpu.dimension_semantics<parallel>], iteration_bounds = array<i64: 2>, scalar_prefetch = 0 : i64, scratch_operands = 0 : i64, tpu.core_type = #tpu.core_type<tc>, window_params = [{transform_indices = @transform_0, window_bounds = array<i64: 1, 16, 64>}, {pipeline_mode = #tpu.pipeline_mode<synchronous>, transform_indices = @transform_1, window_bounds = array<i64: 64, 192>}, {pipeline_mode = #tpu.pipeline_mode<synchronous>, transform_indices = @transform_2, window_bounds = array<i64: 64, 128>}, {pipeline_mode = #tpu.pipeline_mode<synchronous>, transform_indices = @transform_3, window_bounds = array<i64: 1, 128>}, {transform_indices = @transform_4, window_bounds = array<i64: 1, 16, 128>}]} {
    %c0 = arith.constant 0 : index
    %c0_0 = arith.constant 0 : index
    %c0_1 = arith.constant 0 : index
    %0 = vector.load %arg1[%c0, %c0_0, %c0_1] : memref<1x16x64xbf16, #tpu.memory_space<vmem>>, vector<1x16x64xbf16>
    %1 = vector.shape_cast %0 : vector<1x16x64xbf16> to vector<16x64xbf16>
    %c0_2 = arith.constant 0 : index
    %c0_3 = arith.constant 0 : index
    %2 = vector.load %arg2[%c0_2, %c0_3] : memref<64x192xbf16, #tpu.memory_space<vmem>>, vector<64x192xbf16>
    %cst = arith.constant dense<0.000000e+00> : vector<16x192xf32>
    %3 = tpu.matmul %1, %2, %cst {dimension_numbers = #tpu.dot_dimension_numbers<[1], [0], [0], [1], [0, 0, 1, 1], [], []>} : vector<16x64xbf16>, vector<64x192xbf16>, vector<16x192xf32> -> vector<16x192xf32>
    %4 = arith.truncf %3 : vector<16x192xf32> to vector<16x192xbf16>
    %5 = vector.extract_strided_slice %4 {offsets = [0, 0], sizes = [16, 8], strides = [1, 1]} : vector<16x192xbf16> to vector<16x8xbf16>
    %6 = vector.extract_strided_slice %4 {offsets = [0, 64], sizes = [16, 8], strides = [1, 1]} : vector<16x192xbf16> to vector<16x8xbf16>
    %7 = vector.extract_strided_slice %4 {offsets = [0, 128], sizes = [16, 8], strides = [1, 1]} : vector<16x192xbf16> to vector<16x8xbf16>
    %cst_4 = arith.constant dense<0.000000e+00> : vector<16x16xf32>
    %8 = tpu.matmul %5, %6, %cst_4 {dimension_numbers = #tpu.dot_dimension_numbers<[1], [1], [0], [0], [0, 0, 1, 0], [], []>} : vector<16x8xbf16>, vector<16x8xbf16>, vector<16x16xf32> -> vector<16x16xf32>
    %cst_5 = arith.constant dense<0xFF800000> : vector<16xf32>
    %9 = vector.multi_reduction <maximumf>, %8, %cst_5 [1] : vector<16x16xf32> to vector<16xf32>
    %10 = vector.shape_cast %9 : vector<16xf32> to vector<16x1xf32>
    %11 = vector.broadcast %10 : vector<16x1xf32> to vector<16x16xf32>
    %12 = arith.subf %8, %11 : vector<16x16xf32>
    %13 = math.exp %12 : vector<16x16xf32>
    %cst_6 = arith.constant dense<0.000000e+00> : vector<16xf32>
    %14 = vector.multi_reduction <add>, %13, %cst_6 [1] : vector<16x16xf32> to vector<16xf32>
    %15 = vector.shape_cast %14 : vector<16xf32> to vector<16x1xf32>
    %16 = tpu.reciprocal %15 {approx = true} : vector<16x1xf32> -> vector<16x1xf32>
    %17 = vector.broadcast %16 : vector<16x1xf32> to vector<16x16xf32>
    %18 = arith.mulf %13, %17 : vector<16x16xf32>
    %19 = arith.truncf %18 : vector<16x16xf32> to vector<16x16xbf16>
    %cst_7 = arith.constant dense<0.000000e+00> : vector<16x8xf32>
    %20 = tpu.matmul %19, %7, %cst_7 {dimension_numbers = #tpu.dot_dimension_numbers<[1], [0], [0], [1], [0, 0, 1, 1], [], []>} : vector<16x16xbf16>, vector<16x8xbf16>, vector<16x8xf32> -> vector<16x8xf32>
    %21 = arith.truncf %20 : vector<16x8xf32> to vector<16x8xbf16>
    %22 = vector.extract_strided_slice %4 {offsets = [0, 8], sizes = [16, 8], strides = [1, 1]} : vector<16x192xbf16> to vector<16x8xbf16>
    %23 = vector.extract_strided_slice %4 {offsets = [0, 72], sizes = [16, 8], strides = [1, 1]} : vector<16x192xbf16> to vector<16x8xbf16>
    %24 = vector.extract_strided_slice %4 {offsets = [0, 136], sizes = [16, 8], strides = [1, 1]} : vector<16x192xbf16> to vector<16x8xbf16>
    %cst_8 = arith.constant dense<0.000000e+00> : vector<16x16xf32>
    %25 = tpu.matmul %22, %23, %cst_8 {dimension_numbers = #tpu.dot_dimension_numbers<[1], [1], [0], [0], [0, 0, 1, 0], [], []>} : vector<16x8xbf16>, vector<16x8xbf16>, vector<16x16xf32> -> vector<16x16xf32>
    %cst_9 = arith.constant dense<0xFF800000> : vector<16xf32>
    %26 = vector.multi_reduction <maximumf>, %25, %cst_9 [1] : vector<16x16xf32> to vector<16xf32>
    %27 = vector.shape_cast %26 : vector<16xf32> to vector<16x1xf32>
    %28 = vector.broadcast %27 : vector<16x1xf32> to vector<16x16xf32>
    %29 = arith.subf %25, %28 : vector<16x16xf32>
    %30 = math.exp %29 : vector<16x16xf32>
    %cst_10 = arith.constant dense<0.000000e+00> : vector<16xf32>
    %31 = vector.multi_reduction <add>, %30, %cst_10 [1] : vector<16x16xf32> to vector<16xf32>
    %32 = vector.shape_cast %31 : vector<16xf32> to vector<16x1xf32>
    %33 = tpu.reciprocal %32 {approx = true} : vector<16x1xf32> -> vector<16x1xf32>
    %34 = vector.broadcast %33 : vector<16x1xf32> to vector<16x16xf32>
    %35 = arith.mulf %30, %34 : vector<16x16xf32>
    %36 = arith.truncf %35 : vector<16x16xf32> to vector<16x16xbf16>
    %cst_11 = arith.constant dense<0.000000e+00> : vector<16x8xf32>
    %37 = tpu.matmul %36, %24, %cst_11 {dimension_numbers = #tpu.dot_dimension_numbers<[1], [0], [0], [1], [0, 0, 1, 1], [], []>} : vector<16x16xbf16>, vector<16x8xbf16>, vector<16x8xf32> -> vector<16x8xf32>
    %38 = arith.truncf %37 : vector<16x8xf32> to vector<16x8xbf16>
    %39 = vector.extract_strided_slice %4 {offsets = [0, 16], sizes = [16, 8], strides = [1, 1]} : vector<16x192xbf16> to vector<16x8xbf16>
    %40 = vector.extract_strided_slice %4 {offsets = [0, 80], sizes = [16, 8], strides = [1, 1]} : vector<16x192xbf16> to vector<16x8xbf16>
    %41 = vector.extract_strided_slice %4 {offsets = [0, 144], sizes = [16, 8], strides = [1, 1]} : vector<16x192xbf16> to vector<16x8xbf16>
    %cst_12 = arith.constant dense<0.000000e+00> : vector<16x16xf32>
    %42 = tpu.matmul %39, %40, %cst_12 {dimension_numbers = #tpu.dot_dimension_numbers<[1], [1], [0], [0], [0, 0, 1, 0], [], []>} : vector<16x8xbf16>, vector<16x8xbf16>, vector<16x16xf32> -> vector<16x16xf32>
    %cst_13 = arith.constant dense<0xFF800000> : vector<16xf32>
    %43 = vector.multi_reduction <maximumf>, %42, %cst_13 [1] : vector<16x16xf32> to vector<16xf32>
    %44 = vector.shape_cast %43 : vector<16xf32> to vector<16x1xf32>
    %45 = vector.broadcast %44 : vector<16x1xf32> to vector<16x16xf32>
    %46 = arith.subf %42, %45 : vector<16x16xf32>
    %47 = math.exp %46 : vector<16x16xf32>
    %cst_14 = arith.constant dense<0.000000e+00> : vector<16xf32>
    %48 = vector.multi_reduction <add>, %47, %cst_14 [1] : vector<16x16xf32> to vector<16xf32>
    %49 = vector.shape_cast %48 : vector<16xf32> to vector<16x1xf32>
    %50 = tpu.reciprocal %49 {approx = true} : vector<16x1xf32> -> vector<16x1xf32>
    %51 = vector.broadcast %50 : vector<16x1xf32> to vector<16x16xf32>
    %52 = arith.mulf %47, %51 : vector<16x16xf32>
    %53 = arith.truncf %52 : vector<16x16xf32> to vector<16x16xbf16>
    %cst_15 = arith.constant dense<0.000000e+00> : vector<16x8xf32>
    %54 = tpu.matmul %53, %41, %cst_15 {dimension_numbers = #tpu.dot_dimension_numbers<[1], [0], [0], [1], [0, 0, 1, 1], [], []>} : vector<16x16xbf16>, vector<16x8xbf16>, vector<16x8xf32> -> vector<16x8xf32>
    %55 = arith.truncf %54 : vector<16x8xf32> to vector<16x8xbf16>
    %56 = vector.extract_strided_slice %4 {offsets = [0, 24], sizes = [16, 8], strides = [1, 1]} : vector<16x192xbf16> to vector<16x8xbf16>
    %57 = vector.extract_strided_slice %4 {offsets = [0, 88], sizes = [16, 8], strides = [1, 1]} : vector<16x192xbf16> to vector<16x8xbf16>
    %58 = vector.extract_strided_slice %4 {offsets = [0, 152], sizes = [16, 8], strides = [1, 1]} : vector<16x192xbf16> to vector<16x8xbf16>
    %cst_16 = arith.constant dense<0.000000e+00> : vector<16x16xf32>
    %59 = tpu.matmul %56, %57, %cst_16 {dimension_numbers = #tpu.dot_dimension_numbers<[1], [1], [0], [0], [0, 0, 1, 0], [], []>} : vector<16x8xbf16>, vector<16x8xbf16>, vector<16x16xf32> -> vector<16x16xf32>
    %cst_17 = arith.constant dense<0xFF800000> : vector<16xf32>
    %60 = vector.multi_reduction <maximumf>, %59, %cst_17 [1] : vector<16x16xf32> to vector<16xf32>
    %61 = vector.shape_cast %60 : vector<16xf32> to vector<16x1xf32>
    %62 = vector.broadcast %61 : vector<16x1xf32> to vector<16x16xf32>
    %63 = arith.subf %59, %62 : vector<16x16xf32>
    %64 = math.exp %63 : vector<16x16xf32>
    %cst_18 = arith.constant dense<0.000000e+00> : vector<16xf32>
    %65 = vector.multi_reduction <add>, %64, %cst_18 [1] : vector<16x16xf32> to vector<16xf32>
    %66 = vector.shape_cast %65 : vector<16xf32> to vector<16x1xf32>
    %67 = tpu.reciprocal %66 {approx = true} : vector<16x1xf32> -> vector<16x1xf32>
    %68 = vector.broadcast %67 : vector<16x1xf32> to vector<16x16xf32>
    %69 = arith.mulf %64, %68 : vector<16x16xf32>
    %70 = arith.truncf %69 : vector<16x16xf32> to vector<16x16xbf16>
    %cst_19 = arith.constant dense<0.000000e+00> : vector<16x8xf32>
    %71 = tpu.matmul %70, %58, %cst_19 {dimension_numbers = #tpu.dot_dimension_numbers<[1], [0], [0], [1], [0, 0, 1, 1], [], []>} : vector<16x16xbf16>, vector<16x8xbf16>, vector<16x8xf32> -> vector<16x8xf32>
    %72 = arith.truncf %71 : vector<16x8xf32> to vector<16x8xbf16>
    %73 = vector.extract_strided_slice %4 {offsets = [0, 32], sizes = [16, 8], strides = [1, 1]} : vector<16x192xbf16> to vector<16x8xbf16>
    %74 = vector.extract_strided_slice %4 {offsets = [0, 96], sizes = [16, 8], strides = [1, 1]} : vector<16x192xbf16> to vector<16x8xbf16>
    %75 = vector.extract_strided_slice %4 {offsets = [0, 160], sizes = [16, 8], strides = [1, 1]} : vector<16x192xbf16> to vector<16x8xbf16>
    %cst_20 = arith.constant dense<0.000000e+00> : vector<16x16xf32>
    %76 = tpu.matmul %73, %74, %cst_20 {dimension_numbers = #tpu.dot_dimension_numbers<[1], [1], [0], [0], [0, 0, 1, 0], [], []>} : vector<16x8xbf16>, vector<16x8xbf16>, vector<16x16xf32> -> vector<16x16xf32>
    %cst_21 = arith.constant dense<0xFF800000> : vector<16xf32>
    %77 = vector.multi_reduction <maximumf>, %76, %cst_21 [1] : vector<16x16xf32> to vector<16xf32>
    %78 = vector.shape_cast %77 : vector<16xf32> to vector<16x1xf32>
    %79 = vector.broadcast %78 : vector<16x1xf32> to vector<16x16xf32>
    %80 = arith.subf %76, %79 : vector<16x16xf32>
    %81 = math.exp %80 : vector<16x16xf32>
    %cst_22 = arith.constant dense<0.000000e+00> : vector<16xf32>
    %82 = vector.multi_reduction <add>, %81, %cst_22 [1] : vector<16x16xf32> to vector<16xf32>
    %83 = vector.shape_cast %82 : vector<16xf32> to vector<16x1xf32>
    %84 = tpu.reciprocal %83 {approx = true} : vector<16x1xf32> -> vector<16x1xf32>
    %85 = vector.broadcast %84 : vector<16x1xf32> to vector<16x16xf32>
    %86 = arith.mulf %81, %85 : vector<16x16xf32>
    %87 = arith.truncf %86 : vector<16x16xf32> to vector<16x16xbf16>
    %cst_23 = arith.constant dense<0.000000e+00> : vector<16x8xf32>
    %88 = tpu.matmul %87, %75, %cst_23 {dimension_numbers = #tpu.dot_dimension_numbers<[1], [0], [0], [1], [0, 0, 1, 1], [], []>} : vector<16x16xbf16>, vector<16x8xbf16>, vector<16x8xf32> -> vector<16x8xf32>
    %89 = arith.truncf %88 : vector<16x8xf32> to vector<16x8xbf16>
    %90 = vector.extract_strided_slice %4 {offsets = [0, 40], sizes = [16, 8], strides = [1, 1]} : vector<16x192xbf16> to vector<16x8xbf16>
    %91 = vector.extract_strided_slice %4 {offsets = [0, 104], sizes = [16, 8], strides = [1, 1]} : vector<16x192xbf16> to vector<16x8xbf16>
    %92 = vector.extract_strided_slice %4 {offsets = [0, 168], sizes = [16, 8], strides = [1, 1]} : vector<16x192xbf16> to vector<16x8xbf16>
    %cst_24 = arith.constant dense<0.000000e+00> : vector<16x16xf32>
    %93 = tpu.matmul %90, %91, %cst_24 {dimension_numbers = #tpu.dot_dimension_numbers<[1], [1], [0], [0], [0, 0, 1, 0], [], []>} : vector<16x8xbf16>, vector<16x8xbf16>, vector<16x16xf32> -> vector<16x16xf32>
    %cst_25 = arith.constant dense<0xFF800000> : vector<16xf32>
    %94 = vector.multi_reduction <maximumf>, %93, %cst_25 [1] : vector<16x16xf32> to vector<16xf32>
    %95 = vector.shape_cast %94 : vector<16xf32> to vector<16x1xf32>
    %96 = vector.broadcast %95 : vector<16x1xf32> to vector<16x16xf32>
    %97 = arith.subf %93, %96 : vector<16x16xf32>
    %98 = math.exp %97 : vector<16x16xf32>
    %cst_26 = arith.constant dense<0.000000e+00> : vector<16xf32>
    %99 = vector.multi_reduction <add>, %98, %cst_26 [1] : vector<16x16xf32> to vector<16xf32>
    %100 = vector.shape_cast %99 : vector<16xf32> to vector<16x1xf32>
    %101 = tpu.reciprocal %100 {approx = true} : vector<16x1xf32> -> vector<16x1xf32>
    %102 = vector.broadcast %101 : vector<16x1xf32> to vector<16x16xf32>
    %103 = arith.mulf %98, %102 : vector<16x16xf32>
    %104 = arith.truncf %103 : vector<16x16xf32> to vector<16x16xbf16>
    %cst_27 = arith.constant dense<0.000000e+00> : vector<16x8xf32>
    %105 = tpu.matmul %104, %92, %cst_27 {dimension_numbers = #tpu.dot_dimension_numbers<[1], [0], [0], [1], [0, 0, 1, 1], [], []>} : vector<16x16xbf16>, vector<16x8xbf16>, vector<16x8xf32> -> vector<16x8xf32>
    %106 = arith.truncf %105 : vector<16x8xf32> to vector<16x8xbf16>
    %107 = vector.extract_strided_slice %4 {offsets = [0, 48], sizes = [16, 8], strides = [1, 1]} : vector<16x192xbf16> to vector<16x8xbf16>
    %108 = vector.extract_strided_slice %4 {offsets = [0, 112], sizes = [16, 8], strides = [1, 1]} : vector<16x192xbf16> to vector<16x8xbf16>
    %109 = vector.extract_strided_slice %4 {offsets = [0, 176], sizes = [16, 8], strides = [1, 1]} : vector<16x192xbf16> to vector<16x8xbf16>
    %cst_28 = arith.constant dense<0.000000e+00> : vector<16x16xf32>
    %110 = tpu.matmul %107, %108, %cst_28 {dimension_numbers = #tpu.dot_dimension_numbers<[1], [1], [0], [0], [0, 0, 1, 0], [], []>} : vector<16x8xbf16>, vector<16x8xbf16>, vector<16x16xf32> -> vector<16x16xf32>
    %cst_29 = arith.constant dense<0xFF800000> : vector<16xf32>
    %111 = vector.multi_reduction <maximumf>, %110, %cst_29 [1] : vector<16x16xf32> to vector<16xf32>
    %112 = vector.shape_cast %111 : vector<16xf32> to vector<16x1xf32>
    %113 = vector.broadcast %112 : vector<16x1xf32> to vector<16x16xf32>
    %114 = arith.subf %110, %113 : vector<16x16xf32>
    %115 = math.exp %114 : vector<16x16xf32>
    %cst_30 = arith.constant dense<0.000000e+00> : vector<16xf32>
    %116 = vector.multi_reduction <add>, %115, %cst_30 [1] : vector<16x16xf32> to vector<16xf32>
    %117 = vector.shape_cast %116 : vector<16xf32> to vector<16x1xf32>
    %118 = tpu.reciprocal %117 {approx = true} : vector<16x1xf32> -> vector<16x1xf32>
    %119 = vector.broadcast %118 : vector<16x1xf32> to vector<16x16xf32>
    %120 = arith.mulf %115, %119 : vector<16x16xf32>
    %121 = arith.truncf %120 : vector<16x16xf32> to vector<16x16xbf16>
    %cst_31 = arith.constant dense<0.000000e+00> : vector<16x8xf32>
    %122 = tpu.matmul %121, %109, %cst_31 {dimension_numbers = #tpu.dot_dimension_numbers<[1], [0], [0], [1], [0, 0, 1, 1], [], []>} : vector<16x16xbf16>, vector<16x8xbf16>, vector<16x8xf32> -> vector<16x8xf32>
    %123 = arith.truncf %122 : vector<16x8xf32> to vector<16x8xbf16>
    %124 = vector.extract_strided_slice %4 {offsets = [0, 56], sizes = [16, 8], strides = [1, 1]} : vector<16x192xbf16> to vector<16x8xbf16>
    %125 = vector.extract_strided_slice %4 {offsets = [0, 120], sizes = [16, 8], strides = [1, 1]} : vector<16x192xbf16> to vector<16x8xbf16>
    %126 = vector.extract_strided_slice %4 {offsets = [0, 184], sizes = [16, 8], strides = [1, 1]} : vector<16x192xbf16> to vector<16x8xbf16>
    %cst_32 = arith.constant dense<0.000000e+00> : vector<16x16xf32>
    %127 = tpu.matmul %124, %125, %cst_32 {dimension_numbers = #tpu.dot_dimension_numbers<[1], [1], [0], [0], [0, 0, 1, 0], [], []>} : vector<16x8xbf16>, vector<16x8xbf16>, vector<16x16xf32> -> vector<16x16xf32>
    %cst_33 = arith.constant dense<0xFF800000> : vector<16xf32>
    %128 = vector.multi_reduction <maximumf>, %127, %cst_33 [1] : vector<16x16xf32> to vector<16xf32>
    %129 = vector.shape_cast %128 : vector<16xf32> to vector<16x1xf32>
    %130 = vector.broadcast %129 : vector<16x1xf32> to vector<16x16xf32>
    %131 = arith.subf %127, %130 : vector<16x16xf32>
    %132 = math.exp %131 : vector<16x16xf32>
    %cst_34 = arith.constant dense<0.000000e+00> : vector<16xf32>
    %133 = vector.multi_reduction <add>, %132, %cst_34 [1] : vector<16x16xf32> to vector<16xf32>
    %134 = vector.shape_cast %133 : vector<16xf32> to vector<16x1xf32>
    %135 = tpu.reciprocal %134 {approx = true} : vector<16x1xf32> -> vector<16x1xf32>
    %136 = vector.broadcast %135 : vector<16x1xf32> to vector<16x16xf32>
    %137 = arith.mulf %132, %136 : vector<16x16xf32>
    %138 = arith.truncf %137 : vector<16x16xf32> to vector<16x16xbf16>
    %cst_35 = arith.constant dense<0.000000e+00> : vector<16x8xf32>
    %139 = tpu.matmul %138, %126, %cst_35 {dimension_numbers = #tpu.dot_dimension_numbers<[1], [0], [0], [1], [0, 0, 1, 1], [], []>} : vector<16x16xbf16>, vector<16x8xbf16>, vector<16x8xf32> -> vector<16x8xf32>
    %140 = arith.truncf %139 : vector<16x8xf32> to vector<16x8xbf16>
    %141 = tpu.concatenate %21, %38, %55, %72, %89, %106, %123, %140 in 1 : vector<16x8xbf16>, vector<16x8xbf16>, vector<16x8xbf16>, vector<16x8xbf16>, vector<16x8xbf16>, vector<16x8xbf16>, vector<16x8xbf16>, vector<16x8xbf16> -> vector<16x64xbf16>
    %c0_36 = arith.constant 0 : index
    %c0_37 = arith.constant 0 : index
    %142 = vector.load %arg3[%c0_36, %c0_37] : memref<64x128xbf16, #tpu.memory_space<vmem>>, vector<64x128xbf16>
    %cst_38 = arith.constant dense<0.000000e+00> : vector<16x128xf32>
    %143 = tpu.matmul %141, %142, %cst_38 {dimension_numbers = #tpu.dot_dimension_numbers<[1], [0], [0], [1], [0, 0, 1, 1], [], []>} : vector<16x64xbf16>, vector<64x128xbf16>, vector<16x128xf32> -> vector<16x128xf32>
    %c0_39 = arith.constant 0 : index
    %c0_40 = arith.constant 0 : index
    %144 = vector.load %arg4[%c0_39, %c0_40] : memref<1x128xf32, #tpu.memory_space<vmem>>, vector<1x128xf32>
    %145 = vector.broadcast %144 : vector<1x128xf32> to vector<16x128xf32>
    %146 = arith.addf %143, %145 : vector<16x128xf32>
    %c0_41 = arith.constant 0 : index
    %c0_42 = arith.constant 0 : index
    %c0_43 = arith.constant 0 : index
    %147 = vector.load %arg5[%c0_41, %c0_42, %c0_43] : memref<1x16x128xf32, #tpu.memory_space<vmem>>, vector<1x16x128xf32>
    %148 = vector.shape_cast %147 : vector<1x16x128xf32> to vector<16x128xf32>
    %149 = vector.shape_cast %146 : vector<16x128xf32> to vector<1x16x128xf32>
    tpu.vector_store %arg5[%c0_41, %c0_42, %c0_43], %149 {strides = array<i32>} : memref<1x16x128xf32, #tpu.memory_space<vmem>>, vector<1x16x128xf32>,
    return
  }
  func.func @transform_0(%arg0: i32) -> (i32, i32, i32) {
    %c0_i32 = arith.constant 0 : i32
    %c0_i32_0 = arith.constant 0 : i32
    %c0_i32_1 = arith.constant 0 : i32
    return %arg0, %c0_i32, %c0_i32_0 : i32, i32, i32
  }
  func.func @transform_1(%arg0: i32) -> (i32, i32) {
    %c0_i32 = arith.constant 0 : i32
    %c0_i32_0 = arith.constant 0 : i32
    %c0_i32_1 = arith.constant 0 : i32
    return %c0_i32, %c0_i32_0 : i32, i32
  }
  func.func @transform_2(%arg0: i32) -> (i32, i32) {
    %c0_i32 = arith.constant 0 : i32
    %c0_i32_0 = arith.constant 0 : i32
    %c0_i32_1 = arith.constant 0 : i32
    return %c0_i32, %c0_i32_0 : i32, i32
  }
  func.func @transform_3(%arg0: i32) -> (i32, i32) {
    %c0_i32 = arith.constant 0 : i32
    %c0_i32_0 = arith.constant 0 : i32
    %c0_i32_1 = arith.constant 0 : i32
    return %c0_i32, %c0_i32_0 : i32, i32
  }
  func.func @transform_4(%arg0: i32) -> (i32, i32, i32) {
    %c0_i32 = arith.constant 0 : i32
    %c0_i32_0 = arith.constant 0 : i32
    %c0_i32_1 = arith.constant 0 : i32
    return %arg0, %c0_i32, %c0_i32_0 : i32, i32, i32
  }
}

</mosaic_0001>

<llo_original>
// kernel: tpu_custom_call.1
$region0: #{tpu_custom_call.1}
  #allocation0 [shape = 'u32[]', space=smem, size = 0x4, offset = 0x4, fixed_abs, tag = 'smem constant byte address 0x4 - core index']
  #allocation1 [shape = 'u32[144,128]{1,0:T(1,128)}', space=vmem, size = 0x12000, scoped, tag = 'internal scratch']
  %s0 = inlined_call_operand.hbm [shape: bf16[2,16,64], index: 0, kind: input, shape index: {}]
  %s1 = inlined_call_operand.hbm [shape: bf16[64,192], index: 1, kind: input, shape index: {}]
  %s2 = inlined_call_operand.hbm [shape: bf16[64,128], index: 2, kind: input, shape index: {}]
  %s3 = inlined_call_operand.vmem [shape: f32[1,128], index: 3, kind: input, shape index: {}]
  %s4 = inlined_call_operand.hbm [shape: f32[2,16,128], index: 4, kind: output, shape index: {}]
  %s5 = sld [smem:[#allocation0]]
  $region61: #{tpu_custom_call.1} parent=0
    _
  %s7 = ssub.s32 1, %s5
  %s8 = scalar_select 0, %s7, %s5
  $region1: #{tpu_custom_call.1} parent=0
    #allocation2 [shape = 'u8[8192]{0}', space=vmem, size = 0x2000, scoped, tag = 'input window, operand 0']
    #allocation3 [shape = 's32[2]{0}', space=sflag, size = 0x8, scoped, tag = 'scoped memory for tpu_custom_call.1']
    #allocation4 [shape = 's32[2]{0}', space=sflag, size = 0x8, scoped, tag = 'scoped memory for tpu_custom_call.1']
    #allocation5 [shape = 'u8[32768]{0}', space=vmem, size = 0x8000, scoped, tag = 'input window, operand 1, single buffered']
    #allocation6 [shape = 's32[1]{0}', space=sflag, size = 0x4, scoped, tag = 'scoped memory for tpu_custom_call.1']
    #allocation7 [shape = 'u8[16384]{0}', space=vmem, size = 0x4000, scoped, tag = 'input window, operand 2, single buffered']
    #allocation8 [shape = 'u8[16384]{0}', space=vmem, size = 0x4000, scoped, tag = 'output window, operand 0']
    %9 = vsyncpa [#allocation3], 0
    %s10 = scalar_lea.sflag [#allocation3], 1
    %11 = vsyncpa %s10, 0
    %12 = vsyncpa [#allocation6], 0
    %13 = vsyncpa [#allocation4], 0
    %s14 = scalar_lea.sflag [#allocation4], 1
    %15 = vsyncpa %s14, 0
    loop: start=0, step=1, limit=4
    $region2: #{tpu_custom_call.1} parent=1 // loop_pre_header
      _
    $region3: #{tpu_custom_call.1} parent=1 // loop_header
      %s17 = sphi 0, %s21
      %p18 = scmp.ge.s32.totalorder %s17, 4
      %s27 = sphi 0, %s29
      %s30 = sphi 0, %s27
      %s31 = sphi 0, %s30
      %s47 = sphi 0, %s31
      %s51 = sphi 0, %s51
      %s53 = sphi 0, %s51
      %s54 = sphi 0, %s53
      %s68 = sphi 0, %s54
      %s72 = sphi 0, %s72
      %s74 = sphi 0, %s72
      %s75 = sphi 0, %s74
      %s89 = sphi 0, %s75
      %s93 = sphi 0, %s93
      %s95 = sphi 0, %s93
      %s96 = sphi 0, %s95
      %s110 = sphi 0, %s96
      %s116 = sphi 0, %s118
      %s119 = sphi 0, %s116
      %s120 = sphi 0, %s119
      %s136 = sphi 0, %s120
    $region4: #{tpu_custom_call.1} parent=1 // loop_header_branch
      %20 = sbr.rel (%p18) target = $region8
    $region5: #{tpu_custom_call.1} parent=1 // loop_body
      %s22 = ssub.s32 %s17, 1
      %s23 = ssub.s32 %s17, 2
      %s24 = sadd.s32 %s17, 1
      %s25 = ssub.s32 %s17, %s24
      %p26 = scmp.eq.s32.totalorder %s25, 0
      %s28 = sadd.s32 %s27, 1
      %s29 = scalar_select %p26, %s27, %s28
      %p32 = pneg %p26
      %p33 = scmp.eq.s32.totalorder %s17, 1
      %p34 = por %p32, %p33
      %p35 = scmp.ne.s32.totalorder %s27, %s30
      %p36 = scmp.eq.s32.totalorder %s17, 0
      %p37 = por %p35, %p36
      %p38 = scmp.ne.s32.totalorder %s27, %s30
      %p39 = scmp.eq.s32.totalorder %s22, 1
      %p40 = por %p38, %p39
      %p41 = scmp.ne.s32.totalorder %s30, %s31
      %p42 = scmp.eq.s32.totalorder %s22, 0
      %p43 = por %p41, %p42
      %p44 = scmp.ne.s32.totalorder %s30, %s31
      %p45 = scmp.eq.s32.totalorder %s23, 1
      %p46 = por %p44, %p45
      %p48 = scmp.ne.s32.totalorder %s31, %s47
      %p49 = scmp.eq.s32.totalorder %s23, 0
      %p50 = por %p48, %p49
      %s52 = sadd.s32 %s51, 1
      %p55 = scmp.eq.s32.totalorder %s17, 1
      %p56 = scmp.ne.s32.totalorder %s51, %s53
      %p57 = scmp.eq.s32.totalorder %s17, 0
      %p58 = por %p56, %p57
      %p59 = scmp.ne.s32.totalorder %s51, %s53
      %p60 = scmp.eq.s32.totalorder %s22, 1
      %p61 = por %p59, %p60
      %p62 = scmp.ne.s32.totalorder %s53, %s54
      %p63 = scmp.eq.s32.totalorder %s22, 0
      %p64 = por %p62, %p63
      %p65 = scmp.ne.s32.totalorder %s53, %s54
      %p66 = scmp.eq.s32.totalorder %s23, 1
      %p67 = por %p65, %p66
      %p69 = scmp.ne.s32.totalorder %s54, %s68
      %p70 = scmp.eq.s32.totalorder %s23, 0
      %p71 = por %p69, %p70
      %s73 = sadd.s32 %s72, 1
      %p76 = scmp.eq.s32.totalorder %s17, 1
      %p77 = scmp.ne.s32.totalorder %s72, %s74
      %p78 = scmp.eq.s32.totalorder %s17, 0
      %p79 = por %p77, %p78
      %p80 = scmp.ne.s32.totalorder %s72, %s74
      %p81 = scmp.eq.s32.totalorder %s22, 1
      %p82 = por %p80, %p81
      %p83 = scmp.ne.s32.totalorder %s74, %s75
      %p84 = scmp.eq.s32.totalorder %s22, 0
      %p85 = por %p83, %p84
      %p86 = scmp.ne.s32.totalorder %s74, %s75
      %p87 = scmp.eq.s32.totalorder %s23, 1
      %p88 = por %p86, %p87
      %p90 = scmp.ne.s32.totalorder %s75, %s89
      %p91 = scmp.eq.s32.totalorder %s23, 0
      %p92 = por %p90, %p91
      %s94 = sadd.s32 %s93, 1
      %p97 = scmp.eq.s32.totalorder %s17, 1
      %p98 = scmp.ne.s32.totalorder %s93, %s95
      %p99 = scmp.eq.s32.totalorder %s17, 0
      %p100 = por %p98, %p99
      %p101 = scmp.ne.s32.totalorder %s93, %s95
      %p102 = scmp.eq.s32.totalorder %s22, 1
      %p103 = por %p101, %p102
      %p104 = scmp.ne.s32.totalorder %s95, %s96
      %p105 = scmp.eq.s32.totalorder %s22, 0
      %p106 = por %p104, %p105
      %p107 = scmp.ne.s32.totalorder %s95, %s96
      %p108 = scmp.eq.s32.totalorder %s23, 1
      %p109 = por %p107, %p108
      %p111 = scmp.ne.s32.totalorder %s96, %s110
      %p112 = scmp.eq.s32.totalorder %s23, 0
      %p113 = por %p111, %p112
      %s114 = ssub.s32 %s17, %s24
      %p115 = scmp.eq.s32.totalorder %s114, 0
      %s117 = sadd.s32 %s116, 1
      %s118 = scalar_select %p115, %s116, %s117
      %p121 = pneg %p115
      %p122 = scmp.eq.s32.totalorder %s17, 1
      %p123 = por %p121, %p122
      %p124 = scmp.ne.s32.totalorder %s116, %s119
      %p125 = scmp.eq.s32.totalorder %s17, 0
      %p126 = por %p124, %p125
      %p127 = scmp.ne.s32.totalorder %s116, %s119
      %p128 = scmp.eq.s32.totalorder %s22, 1
      %p129 = por %p127, %p128
      %p130 = scmp.ne.s32.totalorder %s119, %s120
      %p131 = scmp.eq.s32.totalorder %s22, 0
      %p132 = por %p130, %p131
      %p133 = scmp.ne.s32.totalorder %s119, %s120
      %p134 = scmp.eq.s32.totalorder %s23, 1
      %p135 = por %p133, %p134
      %p137 = scmp.ne.s32.totalorder %s120, %s136
      %p138 = scmp.eq.s32.totalorder %s23, 0
      %p139 = por %p137, %p138
      %p140 = scmp.le.s32.totalorder 1, %s17
      %p141 = scmp.lt.s32.totalorder %s17, 3
      %p142 = pnand %p140, %p141
      %p143 = pneg %p142
      // Predicated region
      $region9: #{tpu_custom_call.1} parent=5 // pred_check
        _
      $region10: #{tpu_custom_call.1} parent=5 // pred_check_branch
        %145 = sbr.rel (%p142) target = $region12
      $region11: #{tpu_custom_call.1} parent=5 // pred_region
        %s146 = ssub.s32 %s17, 1
        // Predicated region
        $region13: #{tpu_custom_call.1} parent=11 // pred_check
          %p147 = pneg %p64
        $region14: #{tpu_custom_call.1} parent=11 // pred_check_branch
          %149 = sbr.rel (%p147) target = $region16
        $region15: #{tpu_custom_call.1} parent=11 // pred_region
          %s151 = ssub.s32 1024, 1024
          %152 = vsyncadd [#allocation6], %s151
          %s153 = sshll.u32 [#allocation5], 4
          %s154 = int_to_ptr.vmem [resolvable:$true] %s153
          %159 = dma.hbm_to_vmem [thread:$0]  %s1, 1024, %s154, [#allocation6], 128, 128, 8
        $region16: #{tpu_custom_call.1} parent=11 // pred_fallthru
          _
        // Predicated region
        $region17: #{tpu_custom_call.1} parent=11 // pred_check
          %p160 = pneg %p85
        $region18: #{tpu_custom_call.1} parent=11 // pred_check_branch
          %162 = sbr.rel (%p160) target = $region20
        $region19: #{tpu_custom_call.1} parent=11 // pred_region
          %s164 = ssub.s32 512, 512
          %165 = vsyncadd [#allocation6], %s164
          %s166 = sshll.u32 [#allocation7], 4
          %s167 = int_to_ptr.vmem [resolvable:$true] %s166
          %172 = dma.hbm_to_vmem [thread:$0]  %s2, 512, %s167, [#allocation6], 64, 64, 4
        $region20: #{tpu_custom_call.1} parent=11 // pred_fallthru
          _
        // Predicated region
        $region21: #{tpu_custom_call.1} parent=11 // pred_check
          %p173 = pneg %p106
        $region22: #{tpu_custom_call.1} parent=11 // pred_check_branch
          %175 = sbr.rel (%p173) target = $region24
        $region23: #{tpu_custom_call.1} parent=11 // pred_region
          _
        $region24: #{tpu_custom_call.1} parent=11 // pred_fallthru
          _
      $region12: #{tpu_custom_call.1} parent=5 // pred_fallthru
        _
      %p176 = scmp.lt.s32.totalorder %s17, 2
      // Predicated region
      $region25: #{tpu_custom_call.1} parent=5 // pred_check
        %p177 = pneg %p176
      $region26: #{tpu_custom_call.1} parent=5 // pred_check_branch
        %179 = sbr.rel (%p177) target = $region28
      $region27: #{tpu_custom_call.1} parent=5 // pred_region
        // Predicated region
        $region29: #{tpu_custom_call.1} parent=27 // pred_check
          %p180 = pneg %p37
        $region30: #{tpu_custom_call.1} parent=27 // pred_check_branch
          %182 = sbr.rel (%p180) target = $region32
        $region31: #{tpu_custom_call.1} parent=27 // pred_region
          %s183 = sand.u32 %s27, 1
          %s184 = scalar_lea.sflag [#allocation3], %s183
          %s185 = sand.u32 %s27, 1
          %s186 = smul.addr %s185, 8
          %s187 = scalar_lea.vmem [#allocation2], %s186
          %s189 = ssub.s32 128, 128
          %190 = vsyncadd %s184, %s189
          %s191 = smul.addr %s17, 2
          %s192 = smul.addr %s191, 64
          %s193 = scalar_lea.hbm %s0, %s192
          %s194 = sshll.u32 %s187, 4
          %s195 = int_to_ptr.vmem [resolvable:$true] %s194
          %200 = dma.hbm_to_vmem [thread:$0]  %s193, 128, %s195, %s184, 64, 64, 4
        $region32: #{tpu_custom_call.1} parent=27 // pred_fallthru
          _
      $region28: #{tpu_custom_call.1} parent=5 // pred_fallthru
        _
      %p201 = scmp.le.s32.totalorder 1, %s17
      %p202 = scmp.lt.s32.totalorder %s17, 3
      %p203 = pnand %p201, %p202
      %p204 = pneg %p203
      // Predicated region
      $region33: #{tpu_custom_call.1} parent=5 // pred_check
        _
      $region34: #{tpu_custom_call.1} parent=5 // pred_check_branch
        %206 = sbr.rel (%p203) target = $region36
      $region35: #{tpu_custom_call.1} parent=5 // pred_region
        %s207 = ssub.s32 %s17, 1
        %s208 = sand.u32 %s30, 1
        %s209 = scalar_lea.sflag [#allocation3], %s208
        %s210 = sand.u32 %s30, 1
        %s211 = smul.addr %s210, 8
        %s212 = scalar_lea.vmem [#allocation2], %s211
        // Predicated region
        $region37: #{tpu_custom_call.1} parent=35 // pred_check
          %p213 = pneg %p43
        $region38: #{tpu_custom_call.1} parent=35 // pred_check_branch
          %215 = sbr.rel (%p213) target = $region40
        $region39: #{tpu_custom_call.1} parent=35 // pred_region
          %216 = dma.done %s209, 128
        $region40: #{tpu_custom_call.1} parent=35 // pred_fallthru
          _
        // Predicated region
        $region41: #{tpu_custom_call.1} parent=35 // pred_check
          %p217 = pneg %p64
        $region42: #{tpu_custom_call.1} parent=35 // pred_check_branch
          %219 = sbr.rel (%p217) target = $region44
        $region43: #{tpu_custom_call.1} parent=35 // pred_region
          %220 = dma.done [#allocation6], 1024
        $region44: #{tpu_custom_call.1} parent=35 // pred_fallthru
          _
        // Predicated region
        $region45: #{tpu_custom_call.1} parent=35 // pred_check
          %p221 = pneg %p85
        $region46: #{tpu_custom_call.1} parent=35 // pred_check_branch
          %223 = sbr.rel (%p221) target = $region48
        $region47: #{tpu_custom_call.1} parent=35 // pred_region
          %224 = dma.done [#allocation6], 512
        $region48: #{tpu_custom_call.1} parent=35 // pred_fallthru
          _
        %s225 = sand.u32 %s30, 1
        %s226 = scalar_lea.sflag [#allocation3], %s225
        %s227 = sand.u32 %s30, 1
        %s228 = smul.addr %s227, 8
        %s229 = scalar_lea.vmem [#allocation2], %s228
        %p230 = pneg %p43
        %p231 = pneg %p40
        %p232 = pneg %p64
        %p233 = pneg %p61
        %p234 = pneg %p85
        %p235 = pneg %p82
        %p236 = pneg %p106
        %p237 = pneg %p103
        %p238 = pneg %p132
        %p239 = pneg %p129
        %s240 = sand.u32 %s119, 1
        %s241 = scalar_lea.sflag [#allocation4], %s240
        %s242 = sand.u32 %s119, 1
        %s243 = smul.addr %s242, 16
        %s244 = scalar_lea.vmem [#allocation8], %s243
        %v246 = vld [vmem:[%s212] sm:$0xf]
        %v247 = vld [vmem:[%s212 + $0x4] sm:$0xf]
        %v248 = vld [vmem:[#allocation5] sm:$0xff]
        %v249 = vld [vmem:[#allocation5 + $0x8] sm:$0xff]
        %v250 = vld [vmem:[#allocation5 + $0x10] sm:$0xff]
        %v251 = vld [vmem:[#allocation5 + $0x18] sm:$0xff]
        %v252 = vld [vmem:[#allocation5 + $0x20] sm:$0xff]
        %v253 = vld [vmem:[#allocation5 + $0x28] sm:$0xff]
        %v254 = vld [vmem:[#allocation5 + $0x30] sm:$0xff]
        %v255 = vld [vmem:[#allocation5 + $0x38] sm:$0xff]
        %v258 = vunpack.c.l.b16 %v246
        %v259 = vunpack.c.l.b16 %v247
        %v260 = vpack.c.b16 %v259, %v258
        %v269 = vunpack.c.l.b16 %v248
        %v270 = vunpack.c.h.b16 %v248
        %v271 = vunpack.c.l.b16 %v249
        %v272 = vunpack.c.h.b16 %v249
        %v273 = vunpack.c.l.b16 %v250
        %v274 = vunpack.c.h.b16 %v250
        %v275 = vunpack.c.l.b16 %v251
        %v276 = vunpack.c.h.b16 %v251
        %v277 = vunpack.c.l.b16 %v252
        %v278 = vunpack.c.h.b16 %v252
        %v279 = vunpack.c.l.b16 %v253
        %v280 = vunpack.c.h.b16 %v253
        %v281 = vunpack.c.l.b16 %v254
        %v282 = vunpack.c.h.b16 %v254
        %v283 = vunpack.c.l.b16 %v255
        %v284 = vunpack.c.h.b16 %v255
        %v285 = vpack.c.b16 %v271, %v269
        %v286 = vpack.c.b16 %v272, %v270
        %v287 = vpack.c.b16 %v275, %v273
        %v288 = vpack.c.b16 %v276, %v274
        %v289 = vpack.c.b16 %v279, %v277
        %v290 = vpack.c.b16 %v280, %v278
        %v291 = vpack.c.b16 %v283, %v281
        %v292 = vpack.c.b16 %v284, %v282
        %vm301 = vcmask 523264
        %v303 = vsel %vm301, %v260, 0
        %305 = vmatprep.subr.bf16.mxu0 %v286
        %306 = vmatpush1.bf16.msra.mxu0 %v285
        %307 = vmatprep.subr.bf16.mxu0 %v288
        %308 = vmatpush1.bf16.msra.mxu0 %v287
        %309 = vmatprep.subr.bf16.mxu0 %v290
        %310 = vmatpush1.bf16.msra.mxu0 %v289
        %311 = vmatprep.subr.bf16.mxu0 %v292
        %312 = vmatpush1.bf16.msra.mxu0 %v291
        %313 = vmatprep.subr.bf16.mxu0 0
        %314 = vmatpush1.bf16.msra.mxu0 0
        %315 = vmatprep.subr.bf16.mxu0 0
        %316 = vmatpush1.bf16.msra.mxu0 0
        %317 = vmatprep.subr.bf16.mxu0 0
        %318 = vmatpush1.bf16.msra.mxu0 0
        %319 = vmatprep.subr.bf16.mxu0 0
        %320 = vmatpush1.bf16.msra.mxu0 0
        %321 = vmatprep.subr.bf16.mxu0 0
        %322 = vmatpush1.bf16.msra.mxu0 0
        %323 = vmatprep.subr.bf16.mxu0 0
        %324 = vmatpush1.bf16.msra.mxu0 0
        %325 = vmatprep.subr.bf16.mxu0 0
        %326 = vmatpush1.bf16.msra.mxu0 0
        %327 = vmatprep.subr.bf16.mxu0 0
        %328 = vmatpush1.bf16.msra.mxu0 0
        %329 = vmatprep.subr.bf16.mxu0 0
        %330 = vmatpush1.bf16.msra.mxu0 0
        %331 = vmatprep.subr.bf16.mxu0 0
        %332 = vmatpush1.bf16.msra.mxu0 0
        %333 = vmatprep.subr.bf16.mxu0 0
        %334 = vmatpush1.bf16.msra.mxu0 0
        %335 = vmatprep.subr.bf16.mxu0 0
        %336 = vmatpush1.bf16.msra.mxu0 0
        %337 = vmatprep.mubr.bf16.mxu0 0
        %338 = vmatmul.mubr.bf16.gmra.mrb[0].mxu0 %v303
        %v339 = vpop.f32.mrb[0].mxu0
        %v340 = vadd.f32 0.0, %v339
        %v341 = vpop.f32.mrb[0].mxu0
        %v342 = vadd.f32 0.0, %v341
        %v343 = vpop.f32.mrb[0].mxu0
        %v344 = vadd.f32 0.0, %v343
        %v345 = vpop.f32.mrb[0].mxu0
        %v346 = vadd.f32 0.0, %v345
        %347 = vdwg.mxu0
        %v348 = vpack.c.bf16 %v344, %v340
        %v349 = vpack.c.bf16 %v346, %v342
        %351 = vrot.lane.b32.xlu0 %v348, 64
        %v352 = vpop.permute.xlu0 %351
        %vm353 = vcmask 64512
        %v355 = vsel %vm353, %v348, 0
        %v358 = vsel %vm353, %v352, 0
        %360 = vmatprep.subr.bf16.mxu0 0
        %361 = vmatpush1.bf16.xpose.msra.mxu0 %v358
        %362 = vmatprep.subr.bf16.mxu0 0
        %363 = vmatpush1.bf16.xpose.msra.mxu0 0
        %364 = vmatprep.subr.bf16.mxu0 0
        %365 = vmatpush1.bf16.xpose.msra.mxu0 0
        %366 = vmatprep.subr.bf16.mxu0 0
        %367 = vmatpush1.bf16.xpose.msra.mxu0 0
        %368 = vmatprep.subr.bf16.mxu0 0
        %369 = vmatpush1.bf16.xpose.msra.mxu0 0
        %370 = vmatprep.subr.bf16.mxu0 0
        %371 = vmatpush1.bf16.xpose.msra.mxu0 0
        %372 = vmatprep.subr.bf16.mxu0 0
        %373 = vmatpush1.bf16.xpose.msra.mxu0 0
        %374 = vmatprep.subr.bf16.mxu0 0
        %375 = vmatpush1.bf16.xpose.msra.mxu0 0
        %376 = vmatprep.subr.bf16.mxu0 0
        %377 = vmatpush1.bf16.xpose.msra.mxu0 0
        %378 = vmatprep.subr.bf16.mxu0 0
        %379 = vmatpush1.bf16.xpose.msra.mxu0 0
        %380 = vmatprep.subr.bf16.mxu0 0
        %381 = vmatpush1.bf16.xpose.msra.mxu0 0
        %382 = vmatprep.subr.bf16.mxu0 0
        %383 = vmatpush1.bf16.xpose.msra.mxu0 0
        %384 = vmatprep.subr.bf16.mxu0 0
        %385 = vmatpush1.bf16.xpose.msra.mxu0 0
        %386 = vmatprep.subr.bf16.mxu0 0
        %387 = vmatpush1.bf16.xpose.msra.mxu0 0
        %388 = vmatprep.subr.bf16.mxu0 0
        %389 = vmatpush1.bf16.xpose.msra.mxu0 0
        %390 = vmatprep.subr.bf16.mxu0 0
        %391 = vmatpush1.bf16.xpose.msra.mxu0 0
        %392 = vmatprep.mubr.bf16.mxu0 0
        %393 = vmatmul.mubr.bf16.gmra.mrb[0].mxu0 %v355
        %v394 = vpop.f32.mrb[0].mxu0
        %v395 = vadd.f32 0.0, %v394
        %v396 = vpop.f32.mrb[0].mxu0
        %v397 = vpop.f32.mrb[0].mxu0
        %v398 = vadd.f32 0.0, %v397
        %v399 = vpop.f32.mrb[0].mxu0
        %400 = vdwg.mxu0
        %vm401 = vcmask 130048
        %v402 = vsel %vm401, %v395, -inf
        %403 = vmax.xlane.f32.xlu0 %v402
        %v404 = vpop.xlane.xlu0 %403
        %v405 = vsel %vm401, %v398, -inf
        %406 = vmax.xlane.f32.xlu0 %v405
        %v407 = vpop.xlane.xlu0 %406
        %v408 = vsub.f32 %v395, %v404
        %v409 = vsub.f32 %v398, %v407
        %v410 = vmul.f32 %v408, 1.442695
        %v411 = vpow.pop %v410
        %v412 = vmul.f32 %v409, 1.442695
        %v413 = vpow.pop %v412
        %v414 = vsel %vm401, %v411, 0.0
        %415 = vadd.xlane.f32.xlu0 %v414
        %v416 = vpop.xlane.xlu0 %415
        %v417 = vsel %vm401, %v413, 0.0
        %418 = vadd.xlane.f32.xlu0 %v417
        %v419 = vpop.xlane.xlu0 %418
        %v420 = vrcp.pop %v416
        %v421 = vrcp.pop %v419
        %v422 = vmul.f32 %v411, %v420
        %v423 = vmul.f32 %v413, %v421
        %v424 = vpack.c.bf16 %v423, %v422
        %v426 = vsel %vm401, %v424, 0
        %428 = vmatprep.subr.bf16.mxu0 0
        %429 = vmatpush1.bf16.msra.mxu0 %v349
        %430 = vmatprep.subr.bf16.mxu0 0
        %431 = vmatpush1.bf16.msra.mxu0 0
        %432 = vmatprep.subr.bf16.mxu0 0
        %433 = vmatpush1.bf16.msra.mxu0 0
        %434 = vmatprep.subr.bf16.mxu0 0
        %435 = vmatpush1.bf16.msra.mxu0 0
        %436 = vmatprep.subr.bf16.mxu0 0
        %437 = vmatpush1.bf16.msra.mxu0 0
        %438 = vmatprep.subr.bf16.mxu0 0
        %439 = vmatpush1.bf16.msra.mxu0 0
        %440 = vmatprep.subr.bf16.mxu0 0
        %441 = vmatpush1.bf16.msra.mxu0 0
        %442 = vmatprep.subr.bf16.mxu0 0
        %443 = vmatpush1.bf16.msra.mxu0 0
        %444 = vmatprep.subr.bf16.mxu0 0
        %445 = vmatpush1.bf16.msra.mxu0 0
        %446 = vmatprep.subr.bf16.mxu0 0
        %447 = vmatpush1.bf16.msra.mxu0 0
        %448 = vmatprep.subr.bf16.mxu0 0
        %449 = vmatpush1.bf16.msra.mxu0 0
        %450 = vmatprep.subr.bf16.mxu0 0
        %451 = vmatpush1.bf16.msra.mxu0 0
        %452 = vmatprep.subr.bf16.mxu0 0
        %453 = vmatpush1.bf16.msra.mxu0 0
        %454 = vmatprep.subr.bf16.mxu0 0
        %455 = vmatpush1.bf16.msra.mxu0 0
        %456 = vmatprep.subr.bf16.mxu0 0
        %457 = vmatpush1.bf16.msra.mxu0 0
        %458 = vmatprep.subr.bf16.mxu0 0
        %459 = vmatpush1.bf16.msra.mxu0 0
        %460 = vmatprep.mubr.bf16.mxu0 0
        %461 = vmatmul.mubr.bf16.gmra.mrb[0].mxu0 %v426
        %v462 = vpop.f32.mrb[0].mxu0
        %v463 = vadd.f32 0.0, %v462
        %v464 = vpop.f32.mrb[0].mxu0
        %v465 = vpop.f32.mrb[0].mxu0
        %v466 = vadd.f32 0.0, %v465
        %v467 = vpop.f32.mrb[0].mxu0
        %468 = vdwg.mxu0
        %v469 = vpack.c.bf16 %v466, %v463
        %470 = vrot.lane.b32.xlu0 %v348, 120
        %v471 = vpop.permute.xlu0 %470
        %472 = vrot.lane.b32.xlu0 %v348, 56
        %v473 = vpop.permute.xlu0 %472
        %v475 = vsel %vm353, %v471, 0
        %v478 = vsel %vm353, %v473, 0
        %480 = vmatprep.subr.bf16.mxu0 0
        %481 = vmatpush1.bf16.xpose.msra.mxu0 %v478
        %482 = vmatprep.subr.bf16.mxu0 0
        %483 = vmatpush1.bf16.xpose.msra.mxu0 0
        %484 = vmatprep.subr.bf16.mxu0 0
        %485 = vmatpush1.bf16.xpose.msra.mxu0 0
        %486 = vmatprep.subr.bf16.mxu0 0
        %487 = vmatpush1.bf16.xpose.msra.mxu0 0
        %488 = vmatprep.subr.bf16.mxu0 0
        %489 = vmatpush1.bf16.xpose.msra.mxu0 0
        %490 = vmatprep.subr.bf16.mxu0 0
        %491 = vmatpush1.bf16.xpose.msra.mxu0 0
        %492 = vmatprep.subr.bf16.mxu0 0
        %493 = vmatpush1.bf16.xpose.msra.mxu0 0
        %494 = vmatprep.subr.bf16.mxu0 0
        %495 = vmatpush1.bf16.xpose.msra.mxu0 0
        %496 = vmatprep.subr.bf16.mxu0 0
        %497 = vmatpush1.bf16.xpose.msra.mxu0 0
        %498 = vmatprep.subr.bf16.mxu0 0
        %499 = vmatpush1.bf16.xpose.msra.mxu0 0
        %500 = vmatprep.subr.bf16.mxu0 0
        %501 = vmatpush1.bf16.xpose.msra.mxu0 0
        %502 = vmatprep.subr.bf16.mxu0 0
        %503 = vmatpush1.bf16.xpose.msra.mxu0 0
        %504 = vmatprep.subr.bf16.mxu0 0
        %505 = vmatpush1.bf16.xpose.msra.mxu0 0
        %506 = vmatprep.subr.bf16.mxu0 0
        %507 = vmatpush1.bf16.xpose.msra.mxu0 0
        %508 = vmatprep.subr.bf16.mxu0 0
        %509 = vmatpush1.bf16.xpose.msra.mxu0 0
        %510 = vmatprep.subr.bf16.mxu0 0
        %511 = vmatpush1.bf16.xpose.msra.mxu0 0
        %512 = vmatprep.mubr.bf16.mxu0 0
        %513 = vmatmul.mubr.bf16.gmra.mrb[0].mxu0 %v475
        %v514 = vpop.f32.mrb[0].mxu0
        %v515 = vadd.f32 0.0, %v514
        %v516 = vpop.f32.mrb[0].mxu0
        %v517 = vpop.f32.mrb[0].mxu0
        %v518 = vadd.f32 0.0, %v517
        %v519 = vpop.f32.mrb[0].mxu0
        %520 = vdwg.mxu0
        %v521 = vsel %vm401, %v515, -inf
        %522 = vmax.xlane.f32.xlu0 %v521
        %v523 = vpop.xlane.xlu0 %522
        %v524 = vsel %vm401, %v518, -inf
        %525 = vmax.xlane.f32.xlu0 %v524
        %v526 = vpop.xlane.xlu0 %525
        %v527 = vsub.f32 %v515, %v523
        %v528 = vsub.f32 %v518, %v526
        %v529 = vmul.f32 %v527, 1.442695
        %v530 = vpow.pop %v529
        %v531 = vmul.f32 %v528, 1.442695
        %v532 = vpow.pop %v531
        %v533 = vsel %vm401, %v530, 0.0
        %534 = vadd.xlane.f32.xlu0 %v533
        %v535 = vpop.xlane.xlu0 %534
        %v536 = vsel %vm401, %v532, 0.0
        %537 = vadd.xlane.f32.xlu0 %v536
        %v538 = vpop.xlane.xlu0 %537
        %v539 = vrcp.pop %v535
        %v540 = vrcp.pop %v538
        %v541 = vmul.f32 %v530, %v539
        %v542 = vmul.f32 %v532, %v540
        %v543 = vpack.c.bf16 %v542, %v541
        %545 = vrot.lane.b32.xlu0 %v349, 120
        %v546 = vpop.permute.xlu0 %545
        %v549 = vsel %vm401, %v543, 0
        %551 = vmatprep.subr.bf16.mxu0 0
        %552 = vmatpush1.bf16.msra.mxu0 %v546
        %553 = vmatprep.subr.bf16.mxu0 0
        %554 = vmatpush1.bf16.msra.mxu0 0
        %555 = vmatprep.subr.bf16.mxu0 0
        %556 = vmatpush1.bf16.msra.mxu0 0
        %557 = vmatprep.subr.bf16.mxu0 0
        %558 = vmatpush1.bf16.msra.mxu0 0
        %559 = vmatprep.subr.bf16.mxu0 0
        %560 = vmatpush1.bf16.msra.mxu0 0
        %561 = vmatprep.subr.bf16.mxu0 0
        %562 = vmatpush1.bf16.msra.mxu0 0
        %563 = vmatprep.subr.bf16.mxu0 0
        %564 = vmatpush1.bf16.msra.mxu0 0
        %565 = vmatprep.subr.bf16.mxu0 0
        %566 = vmatpush1.bf16.msra.mxu0 0
        %567 = vmatprep.subr.bf16.mxu0 0
        %568 = vmatpush1.bf16.msra.mxu0 0
        %569 = vmatprep.subr.bf16.mxu0 0
        %570 = vmatpush1.bf16.msra.mxu0 0
        %571 = vmatprep.subr.bf16.mxu0 0
        %572 = vmatpush1.bf16.msra.mxu0 0
        %573 = vmatprep.subr.bf16.mxu0 0
        %574 = vmatpush1.bf16.msra.mxu0 0
        %575 = vmatprep.subr.bf16.mxu0 0
        %576 = vmatpush1.bf16.msra.mxu0 0
        %577 = vmatprep.subr.bf16.mxu0 0
        %578 = vmatpush1.bf16.msra.mxu0 0
        %579 = vmatprep.subr.bf16.mxu0 0
        %580 = vmatpush1.bf16.msra.mxu0 0
        %581 = vmatprep.subr.bf16.mxu0 0
        %582 = vmatpush1.bf16.msra.mxu0 0
        %583 = vmatprep.mubr.bf16.mxu0 0
        %584 = vmatmul.mubr.bf16.gmra.mrb[0].mxu0 %v549
        %v585 = vpop.f32.mrb[0].mxu0
        %v586 = vadd.f32 0.0, %v585
        %v587 = vpop.f32.mrb[0].mxu0
        %v588 = vpop.f32.mrb[0].mxu0
        %v589 = vadd.f32 0.0, %v588
        %v590 = vpop.f32.mrb[0].mxu0
        %591 = vdwg.mxu0
        %v592 = vpack.c.bf16 %v589, %v586
        %593 = vrot.lane.b32.xlu0 %v348, 112
        %v594 = vpop.permute.xlu0 %593
        %595 = vrot.lane.b32.xlu0 %v348, 48
        %v596 = vpop.permute.xlu0 %595
        %v598 = vsel %vm353, %v594, 0
        %v601 = vsel %vm353, %v596, 0
        %603 = vmatprep.subr.bf16.mxu0 0
        %604 = vmatpush1.bf16.xpose.msra.mxu0 %v601
        %605 = vmatprep.subr.bf16.mxu0 0
        %606 = vmatpush1.bf16.xpose.msra.mxu0 0
        %607 = vmatprep.subr.bf16.mxu0 0
        %608 = vmatpush1.bf16.xpose.msra.mxu0 0
        %609 = vmatprep.subr.bf16.mxu0 0
        %610 = vmatpush1.bf16.xpose.msra.mxu0 0
        %611 = vmatprep.subr.bf16.mxu0 0
        %612 = vmatpush1.bf16.xpose.msra.mxu0 0
        %613 = vmatprep.subr.bf16.mxu0 0
        %614 = vmatpush1.bf16.xpose.msra.mxu0 0
        %615 = vmatprep.subr.bf16.mxu0 0
        %616 = vmatpush1.bf16.xpose.msra.mxu0 0
        %617 = vmatprep.subr.bf16.mxu0 0
        %618 = vmatpush1.bf16.xpose.msra.mxu0 0
        %619 = vmatprep.subr.bf16.mxu0 0
        %620 = vmatpush1.bf16.xpose.msra.mxu0 0
        %621 = vmatprep.subr.bf16.mxu0 0
        %622 = vmatpush1.bf16.xpose.msra.mxu0 0
        %623 = vmatprep.subr.bf16.mxu0 0
        %624 = vmatpush1.bf16.xpose.msra.mxu0 0
        %625 = vmatprep.subr.bf16.mxu0 0
        %626 = vmatpush1.bf16.xpose.msra.mxu0 0
        %627 = vmatprep.subr.bf16.mxu0 0
        %628 = vmatpush1.bf16.xpose.msra.mxu0 0
        %629 = vmatprep.subr.bf16.mxu0 0
        %630 = vmatpush1.bf16.xpose.msra.mxu0 0
        %631 = vmatprep.subr.bf16.mxu0 0
        %632 = vmatpush1.bf16.xpose.msra.mxu0 0
        %633 = vmatprep.subr.bf16.mxu0 0
        %634 = vmatpush1.bf16.xpose.msra.mxu0 0
        %635 = vmatprep.mubr.bf16.mxu0 0
        %636 = vmatmul.mubr.bf16.gmra.mrb[0].mxu0 %v598
        %v637 = vpop.f32.mrb[0].mxu0
        %v638 = vadd.f32 0.0, %v637
        %v639 = vpop.f32.mrb[0].mxu0
        %v640 = vpop.f32.mrb[0].mxu0
        %v641 = vadd.f32 0.0, %v640
        %v642 = vpop.f32.mrb[0].mxu0
        %643 = vdwg.mxu0
        %v644 = vsel %vm401, %v638, -inf
        %645 = vmax.xlane.f32.xlu0 %v644
        %v646 = vpop.xlane.xlu0 %645
        %v647 = vsel %vm401, %v641, -inf
        %648 = vmax.xlane.f32.xlu0 %v647
        %v649 = vpop.xlane.xlu0 %648
        %v650 = vsub.f32 %v638, %v646
        %v651 = vsub.f32 %v641, %v649
        %v652 = vmul.f32 %v650, 1.442695
        %v653 = vpow.pop %v652
        %v654 = vmul.f32 %v651, 1.442695
        %v655 = vpow.pop %v654
        %v656 = vsel %vm401, %v653, 0.0
        %657 = vadd.xlane.f32.xlu0 %v656
        %v658 = vpop.xlane.xlu0 %657
        %v659 = vsel %vm401, %v655, 0.0
        %660 = vadd.xlane.f32.xlu0 %v659
        %v661 = vpop.xlane.xlu0 %660
        %v662 = vrcp.pop %v658
        %v663 = vrcp.pop %v661
        %v664 = vmul.f32 %v653, %v662
        %v665 = vmul.f32 %v655, %v663
        %v666 = vpack.c.bf16 %v665, %v664
        %667 = vrot.lane.b32.xlu0 %v349, 112
        %v668 = vpop.permute.xlu0 %667
        %v671 = vsel %vm401, %v666, 0
        %673 = vmatprep.subr.bf16.mxu0 0
        %674 = vmatpush1.bf16.msra.mxu0 %v668
        %675 = vmatprep.subr.bf16.mxu0 0
        %676 = vmatpush1.bf16.msra.mxu0 0
        %677 = vmatprep.subr.bf16.mxu0 0
        %678 = vmatpush1.bf16.msra.mxu0 0
        %679 = vmatprep.subr.bf16.mxu0 0
        %680 = vmatpush1.bf16.msra.mxu0 0
        %681 = vmatprep.subr.bf16.mxu0 0
        %682 = vmatpush1.bf16.msra.mxu0 0
        %683 = vmatprep.subr.bf16.mxu0 0
        %684 = vmatpush1.bf16.msra.mxu0 0
        %685 = vmatprep.subr.bf16.mxu0 0
        %686 = vmatpush1.bf16.msra.mxu0 0
        %687 = vmatprep.subr.bf16.mxu0 0
        %688 = vmatpush1.bf16.msra.mxu0 0
        %689 = vmatprep.subr.bf16.mxu0 0
        %690 = vmatpush1.bf16.msra.mxu0 0
        %691 = vmatprep.subr.bf16.mxu0 0
        %692 = vmatpush1.bf16.msra.mxu0 0
        %693 = vmatprep.subr.bf16.mxu0 0
        %694 = vmatpush1.bf16.msra.mxu0 0
        %695 = vmatprep.subr.bf16.mxu0 0
        %696 = vmatpush1.bf16.msra.mxu0 0
        %697 = vmatprep.subr.bf16.mxu0 0
        %698 = vmatpush1.bf16.msra.mxu0 0
        %699 = vmatprep.subr.bf16.mxu0 0
        %700 = vmatpush1.bf16.msra.mxu0 0
        %701 = vmatprep.subr.bf16.mxu0 0
        %702 = vmatpush1.bf16.msra.mxu0 0
        %703 = vmatprep.subr.bf16.mxu0 0
        %704 = vmatpush1.bf16.msra.mxu0 0
        %705 = vmatprep.mubr.bf16.mxu0 0
        %706 = vmatmul.mubr.bf16.gmra.mrb[0].mxu0 %v671
        %v707 = vpop.f32.mrb[0].mxu0
        %v708 = vadd.f32 0.0, %v707
        %v709 = vpop.f32.mrb[0].mxu0
        %v710 = vpop.f32.mrb[0].mxu0
        %v711 = vadd.f32 0.0, %v710
        %v712 = vpop.f32.mrb[0].mxu0
        %713 = vdwg.mxu0
        %v714 = vpack.c.bf16 %v711, %v708
        %715 = vrot.lane.b32.xlu0 %v348, 104
        %v716 = vpop.permute.xlu0 %715
        %717 = vrot.lane.b32.xlu0 %v348, 40
        %v718 = vpop.permute.xlu0 %717
        %v720 = vsel %vm353, %v716, 0
        %v723 = vsel %vm353, %v718, 0
        %725 = vmatprep.subr.bf16.mxu0 0
        %726 = vmatpush1.bf16.xpose.msra.mxu0 %v723
        %727 = vmatprep.subr.bf16.mxu0 0
        %728 = vmatpush1.bf16.xpose.msra.mxu0 0
        %729 = vmatprep.subr.bf16.mxu0 0
        %730 = vmatpush1.bf16.xpose.msra.mxu0 0
        %731 = vmatprep.subr.bf16.mxu0 0
        %732 = vmatpush1.bf16.xpose.msra.mxu0 0
        %733 = vmatprep.subr.bf16.mxu0 0
        %734 = vmatpush1.bf16.xpose.msra.mxu0 0
        %735 = vmatprep.subr.bf16.mxu0 0
        %736 = vmatpush1.bf16.xpose.msra.mxu0 0
        %737 = vmatprep.subr.bf16.mxu0 0
        %738 = vmatpush1.bf16.xpose.msra.mxu0 0
        %739 = vmatprep.subr.bf16.mxu0 0
        %740 = vmatpush1.bf16.xpose.msra.mxu0 0
        %741 = vmatprep.subr.bf16.mxu0 0
        %742 = vmatpush1.bf16.xpose.msra.mxu0 0
        %743 = vmatprep.subr.bf16.mxu0 0
        %744 = vmatpush1.bf16.xpose.msra.mxu0 0
        %745 = vmatprep.subr.bf16.mxu0 0
        %746 = vmatpush1.bf16.xpose.msra.mxu0 0
        %747 = vmatprep.subr.bf16.mxu0 0
        %748 = vmatpush1.bf16.xpose.msra.mxu0 0
        %749 = vmatprep.subr.bf16.mxu0 0
        %750 = vmatpush1.bf16.xpose.msra.mxu0 0
        %751 = vmatprep.subr.bf16.mxu0 0
        %752 = vmatpush1.bf16.xpose.msra.mxu0 0
        %753 = vmatprep.subr.bf16.mxu0 0
        %754 = vmatpush1.bf16.xpose.msra.mxu0 0
        %755 = vmatprep.subr.bf16.mxu0 0
        %756 = vmatpush1.bf16.xpose.msra.mxu0 0
        %757 = vmatprep.mubr.bf16.mxu0 0
        %758 = vmatmul.mubr.bf16.gmra.mrb[0].mxu0 %v720
        %v759 = vpop.f32.mrb[0].mxu0
        %v760 = vadd.f32 0.0, %v759
        %v761 = vpop.f32.mrb[0].mxu0
        %v762 = vpop.f32.mrb[0].mxu0
        %v763 = vadd.f32 0.0, %v762
        %v764 = vpop.f32.mrb[0].mxu0
        %765 = vdwg.mxu0
        %v766 = vsel %vm401, %v760, -inf
        %767 = vmax.xlane.f32.xlu0 %v766
        %v768 = vpop.xlane.xlu0 %767
        %v769 = vsel %vm401, %v763, -inf
        %770 = vmax.xlane.f32.xlu0 %v769
        %v771 = vpop.xlane.xlu0 %770
        %v772 = vsub.f32 %v760, %v768
        %v773 = vsub.f32 %v763, %v771
        %v774 = vmul.f32 %v772, 1.442695
        %v775 = vpow.pop %v774
        %v776 = vmul.f32 %v773, 1.442695
        %v777 = vpow.pop %v776
        %v778 = vsel %vm401, %v775, 0.0
        %779 = vadd.xlane.f32.xlu0 %v778
        %v780 = vpop.xlane.xlu0 %779
        %v781 = vsel %vm401, %v777, 0.0
        %782 = vadd.xlane.f32.xlu0 %v781
        %v783 = vpop.xlane.xlu0 %782
        %v784 = vrcp.pop %v780
        %v785 = vrcp.pop %v783
        %v786 = vmul.f32 %v775, %v784
        %v787 = vmul.f32 %v777, %v785
        %v788 = vpack.c.bf16 %v787, %v786
        %789 = vrot.lane.b32.xlu0 %v349, 104
        %v790 = vpop.permute.xlu0 %789
        %v793 = vsel %vm401, %v788, 0
        %795 = vmatprep.subr.bf16.mxu0 0
        %796 = vmatpush1.bf16.msra.mxu0 %v790
        %797 = vmatprep.subr.bf16.mxu0 0
        %798 = vmatpush1.bf16.msra.mxu0 0
        %799 = vmatprep.subr.bf16.mxu0 0
        %800 = vmatpush1.bf16.msra.mxu0 0
        %801 = vmatprep.subr.bf16.mxu0 0
        %802 = vmatpush1.bf16.msra.mxu0 0
        %803 = vmatprep.subr.bf16.mxu0 0
        %804 = vmatpush1.bf16.msra.mxu0 0
        %805 = vmatprep.subr.bf16.mxu0 0
        %806 = vmatpush1.bf16.msra.mxu0 0
        %807 = vmatprep.subr.bf16.mxu0 0
        %808 = vmatpush1.bf16.msra.mxu0 0
        %809 = vmatprep.subr.bf16.mxu0 0
        %810 = vmatpush1.bf16.msra.mxu0 0
        %811 = vmatprep.subr.bf16.mxu0 0
        %812 = vmatpush1.bf16.msra.mxu0 0
        %813 = vmatprep.subr.bf16.mxu0 0
        %814 = vmatpush1.bf16.msra.mxu0 0
        %815 = vmatprep.subr.bf16.mxu0 0
        %816 = vmatpush1.bf16.msra.mxu0 0
        %817 = vmatprep.subr.bf16.mxu0 0
        %818 = vmatpush1.bf16.msra.mxu0 0
        %819 = vmatprep.subr.bf16.mxu0 0
        %820 = vmatpush1.bf16.msra.mxu0 0
        %821 = vmatprep.subr.bf16.mxu0 0
        %822 = vmatpush1.bf16.msra.mxu0 0
        %823 = vmatprep.subr.bf16.mxu0 0
        %824 = vmatpush1.bf16.msra.mxu0 0
        %825 = vmatprep.subr.bf16.mxu0 0
        %826 = vmatpush1.bf16.msra.mxu0 0
        %827 = vmatprep.mubr.bf16.mxu0 0
        %828 = vmatmul.mubr.bf16.gmra.mrb[0].mxu0 %v793
        %v829 = vpop.f32.mrb[0].mxu0
        %v830 = vadd.f32 0.0, %v829
        %v831 = vpop.f32.mrb[0].mxu0
        %v832 = vpop.f32.mrb[0].mxu0
        %v833 = vadd.f32 0.0, %v832
        %v834 = vpop.f32.mrb[0].mxu0
        %835 = vdwg.mxu0
        %v836 = vpack.c.bf16 %v833, %v830
        %837 = vrot.lane.b32.xlu0 %v348, 96
        %v838 = vpop.permute.xlu0 %837
        %839 = vrot.lane.b32.xlu0 %v348, 32
        %v840 = vpop.permute.xlu0 %839
        %v842 = vsel %vm353, %v838, 0
        %v845 = vsel %vm353, %v840, 0
        %847 = vmatprep.subr.bf16.mxu0 0
        %848 = vmatpush1.bf16.xpose.msra.mxu0 %v845
        %849 = vmatprep.subr.bf16.mxu0 0
        %850 = vmatpush1.bf16.xpose.msra.mxu0 0
        %851 = vmatprep.subr.bf16.mxu0 0
        %852 = vmatpush1.bf16.xpose.msra.mxu0 0
        %853 = vmatprep.subr.bf16.mxu0 0
        %854 = vmatpush1.bf16.xpose.msra.mxu0 0
        %855 = vmatprep.subr.bf16.mxu0 0
        %856 = vmatpush1.bf16.xpose.msra.mxu0 0
        %857 = vmatprep.subr.bf16.mxu0 0
        %858 = vmatpush1.bf16.xpose.msra.mxu0 0
        %859 = vmatprep.subr.bf16.mxu0 0
        %860 = vmatpush1.bf16.xpose.msra.mxu0 0
        %861 = vmatprep.subr.bf16.mxu0 0
        %862 = vmatpush1.bf16.xpose.msra.mxu0 0
        %863 = vmatprep.subr.bf16.mxu0 0
        %864 = vmatpush1.bf16.xpose.msra.mxu0 0
        %865 = vmatprep.subr.bf16.mxu0 0
        %866 = vmatpush1.bf16.xpose.msra.mxu0 0
        %867 = vmatprep.subr.bf16.mxu0 0
        %868 = vmatpush1.bf16.xpose.msra.mxu0 0
        %869 = vmatprep.subr.bf16.mxu0 0
        %870 = vmatpush1.bf16.xpose.msra.mxu0 0
        %871 = vmatprep.subr.bf16.mxu0 0
        %872 = vmatpush1.bf16.xpose.msra.mxu0 0
        %873 = vmatprep.subr.bf16.mxu0 0
        %874 = vmatpush1.bf16.xpose.msra.mxu0 0
        %875 = vmatprep.subr.bf16.mxu0 0
        %876 = vmatpush1.bf16.xpose.msra.mxu0 0
        %877 = vmatprep.subr.bf16.mxu0 0
        %878 = vmatpush1.bf16.xpose.msra.mxu0 0
        %879 = vmatprep.mubr.bf16.mxu0 0
        %880 = vmatmul.mubr.bf16.gmra.mrb[0].mxu0 %v842
        %v881 = vpop.f32.mrb[0].mxu0
        %v882 = vadd.f32 0.0, %v881
        %v883 = vpop.f32.mrb[0].mxu0
        %v884 = vpop.f32.mrb[0].mxu0
        %v885 = vadd.f32 0.0, %v884
        %v886 = vpop.f32.mrb[0].mxu0
        %887 = vdwg.mxu0
        %v888 = vsel %vm401, %v882, -inf
        %889 = vmax.xlane.f32.xlu0 %v888
        %v890 = vpop.xlane.xlu0 %889
        %v891 = vsel %vm401, %v885, -inf
        %892 = vmax.xlane.f32.xlu0 %v891
        %v893 = vpop.xlane.xlu0 %892
        %v894 = vsub.f32 %v882, %v890
        %v895 = vsub.f32 %v885, %v893
        %v896 = vmul.f32 %v894, 1.442695
        %v897 = vpow.pop %v896
        %v898 = vmul.f32 %v895, 1.442695
        %v899 = vpow.pop %v898
        %v900 = vsel %vm401, %v897, 0.0
        %901 = vadd.xlane.f32.xlu0 %v900
        %v902 = vpop.xlane.xlu0 %901
        %v903 = vsel %vm401, %v899, 0.0
        %904 = vadd.xlane.f32.xlu0 %v903
        %v905 = vpop.xlane.xlu0 %904
        %v906 = vrcp.pop %v902
        %v907 = vrcp.pop %v905
        %v908 = vmul.f32 %v897, %v906
        %v909 = vmul.f32 %v899, %v907
        %v910 = vpack.c.bf16 %v909, %v908
        %911 = vrot.lane.b32.xlu0 %v349, 96
        %v912 = vpop.permute.xlu0 %911
        %v915 = vsel %vm401, %v910, 0
        %917 = vmatprep.subr.bf16.mxu0 0
        %918 = vmatpush1.bf16.msra.mxu0 %v912
        %919 = vmatprep.subr.bf16.mxu0 0
        %920 = vmatpush1.bf16.msra.mxu0 0
        %921 = vmatprep.subr.bf16.mxu0 0
        %922 = vmatpush1.bf16.msra.mxu0 0
        %923 = vmatprep.subr.bf16.mxu0 0
        %924 = vmatpush1.bf16.msra.mxu0 0
        %925 = vmatprep.subr.bf16.mxu0 0
        %926 = vmatpush1.bf16.msra.mxu0 0
        %927 = vmatprep.subr.bf16.mxu0 0
        %928 = vmatpush1.bf16.msra.mxu0 0
        %929 = vmatprep.subr.bf16.mxu0 0
        %930 = vmatpush1.bf16.msra.mxu0 0
        %931 = vmatprep.subr.bf16.mxu0 0
        %932 = vmatpush1.bf16.msra.mxu0 0
        %933 = vmatprep.subr.bf16.mxu0 0
        %934 = vmatpush1.bf16.msra.mxu0 0
        %935 = vmatprep.subr.bf16.mxu0 0
        %936 = vmatpush1.bf16.msra.mxu0 0
        %937 = vmatprep.subr.bf16.mxu0 0
        %938 = vmatpush1.bf16.msra.mxu0 0
        %939 = vmatprep.subr.bf16.mxu0 0
        %940 = vmatpush1.bf16.msra.mxu0 0
        %941 = vmatprep.subr.bf16.mxu0 0
        %942 = vmatpush1.bf16.msra.mxu0 0
        %943 = vmatprep.subr.bf16.mxu0 0
        %944 = vmatpush1.bf16.msra.mxu0 0
        %945 = vmatprep.subr.bf16.mxu0 0
        %946 = vmatpush1.bf16.msra.mxu0 0
        %947 = vmatprep.subr.bf16.mxu0 0
        %948 = vmatpush1.bf16.msra.mxu0 0
        %949 = vmatprep.mubr.bf16.mxu0 0
        %950 = vmatmul.mubr.bf16.gmra.mrb[0].mxu0 %v915
        %v951 = vpop.f32.mrb[0].mxu0
        %v952 = vadd.f32 0.0, %v951
        %v953 = vpop.f32.mrb[0].mxu0
        %v954 = vpop.f32.mrb[0].mxu0
        %v955 = vadd.f32 0.0, %v954
        %v956 = vpop.f32.mrb[0].mxu0
        %957 = vdwg.mxu0
        %v958 = vpack.c.bf16 %v955, %v952
        %959 = vrot.lane.b32.xlu0 %v348, 88
        %v960 = vpop.permute.xlu0 %959
        %961 = vrot.lane.b32.xlu0 %v348, 24
        %v962 = vpop.permute.xlu0 %961
        %v964 = vsel %vm353, %v960, 0
        %v967 = vsel %vm353, %v962, 0
        %969 = vmatprep.subr.bf16.mxu0 0
        %970 = vmatpush1.bf16.xpose.msra.mxu0 %v967
        %971 = vmatprep.subr.bf16.mxu0 0
        %972 = vmatpush1.bf16.xpose.msra.mxu0 0
        %973 = vmatprep.subr.bf16.mxu0 0
        %974 = vmatpush1.bf16.xpose.msra.mxu0 0
        %975 = vmatprep.subr.bf16.mxu0 0
        %976 = vmatpush1.bf16.xpose.msra.mxu0 0
        %977 = vmatprep.subr.bf16.mxu0 0
        %978 = vmatpush1.bf16.xpose.msra.mxu0 0
        %979 = vmatprep.subr.bf16.mxu0 0
        %980 = vmatpush1.bf16.xpose.msra.mxu0 0
        %981 = vmatprep.subr.bf16.mxu0 0
        %982 = vmatpush1.bf16.xpose.msra.mxu0 0
        %983 = vmatprep.subr.bf16.mxu0 0
        %984 = vmatpush1.bf16.xpose.msra.mxu0 0
        %985 = vmatprep.subr.bf16.mxu0 0
        %986 = vmatpush1.bf16.xpose.msra.mxu0 0
        %987 = vmatprep.subr.bf16.mxu0 0
        %988 = vmatpush1.bf16.xpose.msra.mxu0 0
        %989 = vmatprep.subr.bf16.mxu0 0
        %990 = vmatpush1.bf16.xpose.msra.mxu0 0
        %991 = vmatprep.subr.bf16.mxu0 0
        %992 = vmatpush1.bf16.xpose.msra.mxu0 0
        %993 = vmatprep.subr.bf16.mxu0 0
        %994 = vmatpush1.bf16.xpose.msra.mxu0 0
        %995 = vmatprep.subr.bf16.mxu0 0
        %996 = vmatpush1.bf16.xpose.msra.mxu0 0
        %997 = vmatprep.subr.bf16.mxu0 0
        %998 = vmatpush1.bf16.xpose.msra.mxu0 0
        %999 = vmatprep.subr.bf16.mxu0 0
        %1000 = vmatpush1.bf16.xpose.msra.mxu0 0
        %1001 = vmatprep.mubr.bf16.mxu0 0
        %1002 = vmatmul.mubr.bf16.gmra.mrb[0].mxu0 %v964
        %v1003 = vpop.f32.mrb[0].mxu0
        %v1004 = vadd.f32 0.0, %v1003
        %v1005 = vpop.f32.mrb[0].mxu0
        %v1006 = vpop.f32.mrb[0].mxu0
        %v1007 = vadd.f32 0.0, %v1006
        %v1008 = vpop.f32.mrb[0].mxu0
        %1009 = vdwg.mxu0
        %v1010 = vsel %vm401, %v1004, -inf
        %1011 = vmax.xlane.f32.xlu0 %v1010
        %v1012 = vpop.xlane.xlu0 %1011
        %v1013 = vsel %vm401, %v1007, -inf
        %1014 = vmax.xlane.f32.xlu0 %v1013
        %v1015 = vpop.xlane.xlu0 %1014
        %v1016 = vsub.f32 %v1004, %v1012
        %v1017 = vsub.f32 %v1007, %v1015
        %v1018 = vmul.f32 %v1016, 1.442695
        %v1019 = vpow.pop %v1018
        %v1020 = vmul.f32 %v1017, 1.442695
        %v1021 = vpow.pop %v1020
        %v1022 = vsel %vm401, %v1019, 0.0
        %1023 = vadd.xlane.f32.xlu0 %v1022
        %v1024 = vpop.xlane.xlu0 %1023
        %v1025 = vsel %vm401, %v1021, 0.0
        %1026 = vadd.xlane.f32.xlu0 %v1025
        %v1027 = vpop.xlane.xlu0 %1026
        %v1028 = vrcp.pop %v1024
        %v1029 = vrcp.pop %v1027
        %v1030 = vmul.f32 %v1019, %v1028
        %v1031 = vmul.f32 %v1021, %v1029
        %v1032 = vpack.c.bf16 %v1031, %v1030
        %1033 = vrot.lane.b32.xlu0 %v349, 88
        %v1034 = vpop.permute.xlu0 %1033
        %v1037 = vsel %vm401, %v1032, 0
        %1039 = vmatprep.subr.bf16.mxu0 0
        %1040 = vmatpush1.bf16.msra.mxu0 %v1034
        %1041 = vmatprep.subr.bf16.mxu0 0
        %1042 = vmatpush1.bf16.msra.mxu0 0
        %1043 = vmatprep.subr.bf16.mxu0 0
        %1044 = vmatpush1.bf16.msra.mxu0 0
        %1045 = vmatprep.subr.bf16.mxu0 0
        %1046 = vmatpush1.bf16.msra.mxu0 0
        %1047 = vmatprep.subr.bf16.mxu0 0
        %1048 = vmatpush1.bf16.msra.mxu0 0
        %1049 = vmatprep.subr.bf16.mxu0 0
        %1050 = vmatpush1.bf16.msra.mxu0 0
        %1051 = vmatprep.subr.bf16.mxu0 0
        %1052 = vmatpush1.bf16.msra.mxu0 0
        %1053 = vmatprep.subr.bf16.mxu0 0
        %1054 = vmatpush1.bf16.msra.mxu0 0
        %1055 = vmatprep.subr.bf16.mxu0 0
        %1056 = vmatpush1.bf16.msra.mxu0 0
        %1057 = vmatprep.subr.bf16.mxu0 0
        %1058 = vmatpush1.bf16.msra.mxu0 0
        %1059 = vmatprep.subr.bf16.mxu0 0
        %1060 = vmatpush1.bf16.msra.mxu0 0
        %1061 = vmatprep.subr.bf16.mxu0 0
        %1062 = vmatpush1.bf16.msra.mxu0 0
        %1063 = vmatprep.subr.bf16.mxu0 0
        %1064 = vmatpush1.bf16.msra.mxu0 0
        %1065 = vmatprep.subr.bf16.mxu0 0
        %1066 = vmatpush1.bf16.msra.mxu0 0
        %1067 = vmatprep.subr.bf16.mxu0 0
        %1068 = vmatpush1.bf16.msra.mxu0 0
        %1069 = vmatprep.subr.bf16.mxu0 0
        %1070 = vmatpush1.bf16.msra.mxu0 0
        %1071 = vmatprep.mubr.bf16.mxu0 0
        %1072 = vmatmul.mubr.bf16.gmra.mrb[0].mxu0 %v1037
        %v1073 = vpop.f32.mrb[0].mxu0
        %v1074 = vadd.f32 0.0, %v1073
        %v1075 = vpop.f32.mrb[0].mxu0
        %v1076 = vpop.f32.mrb[0].mxu0
        %v1077 = vadd.f32 0.0, %v1076
        %v1078 = vpop.f32.mrb[0].mxu0
        %1079 = vdwg.mxu0
        %v1080 = vpack.c.bf16 %v1077, %v1074
        %1081 = vrot.lane.b32.xlu0 %v348, 80
        %v1082 = vpop.permute.xlu0 %1081
        %1083 = vrot.lane.b32.xlu0 %v348, 16
        %v1084 = vpop.permute.xlu0 %1083
        %v1086 = vsel %vm353, %v1082, 0
        %v1089 = vsel %vm353, %v1084, 0
        %1091 = vmatprep.subr.bf16.mxu0 0
        %1092 = vmatpush1.bf16.xpose.msra.mxu0 %v1089
        %1093 = vmatprep.subr.bf16.mxu0 0
        %1094 = vmatpush1.bf16.xpose.msra.mxu0 0
        %1095 = vmatprep.subr.bf16.mxu0 0
        %1096 = vmatpush1.bf16.xpose.msra.mxu0 0
        %1097 = vmatprep.subr.bf16.mxu0 0
        %1098 = vmatpush1.bf16.xpose.msra.mxu0 0
        %1099 = vmatprep.subr.bf16.mxu0 0
        %1100 = vmatpush1.bf16.xpose.msra.mxu0 0
        %1101 = vmatprep.subr.bf16.mxu0 0
        %1102 = vmatpush1.bf16.xpose.msra.mxu0 0
        %1103 = vmatprep.subr.bf16.mxu0 0
        %1104 = vmatpush1.bf16.xpose.msra.mxu0 0
        %1105 = vmatprep.subr.bf16.mxu0 0
        %1106 = vmatpush1.bf16.xpose.msra.mxu0 0
        %1107 = vmatprep.subr.bf16.mxu0 0
        %1108 = vmatpush1.bf16.xpose.msra.mxu0 0
        %1109 = vmatprep.subr.bf16.mxu0 0
        %1110 = vmatpush1.bf16.xpose.msra.mxu0 0
        %1111 = vmatprep.subr.bf16.mxu0 0
        %1112 = vmatpush1.bf16.xpose.msra.mxu0 0
        %1113 = vmatprep.subr.bf16.mxu0 0
        %1114 = vmatpush1.bf16.xpose.msra.mxu0 0
        %1115 = vmatprep.subr.bf16.mxu0 0
        %1116 = vmatpush1.bf16.xpose.msra.mxu0 0
        %1117 = vmatprep.subr.bf16.mxu0 0
        %1118 = vmatpush1.bf16.xpose.msra.mxu0 0
        %1119 = vmatprep.subr.bf16.mxu0 0
        %1120 = vmatpush1.bf16.xpose.msra.mxu0 0
        %1121 = vmatprep.subr.bf16.mxu0 0
        %1122 = vmatpush1.bf16.xpose.msra.mxu0 0
        %1123 = vmatprep.mubr.bf16.mxu0 0
        %1124 = vmatmul.mubr.bf16.gmra.mrb[0].mxu0 %v1086
        %v1125 = vpop.f32.mrb[0].mxu0
        %v1126 = vadd.f32 0.0, %v1125
        %v1127 = vpop.f32.mrb[0].mxu0
        %v1128 = vpop.f32.mrb[0].mxu0
        %v1129 = vadd.f32 0.0, %v1128
        %v1130 = vpop.f32.mrb[0].mxu0
        %1131 = vdwg.mxu0
        %v1132 = vsel %vm401, %v1126, -inf
        %1133 = vmax.xlane.f32.xlu0 %v1132
        %v1134 = vpop.xlane.xlu0 %1133
        %v1135 = vsel %vm401, %v1129, -inf
        %1136 = vmax.xlane.f32.xlu0 %v1135
        %v1137 = vpop.xlane.xlu0 %1136
        %v1138 = vsub.f32 %v1126, %v1134
        %v1139 = vsub.f32 %v1129, %v1137
        %v1140 = vmul.f32 %v1138, 1.442695
        %v1141 = vpow.pop %v1140
        %v1142 = vmul.f32 %v1139, 1.442695
        %v1143 = vpow.pop %v1142
        %v1144 = vsel %vm401, %v1141, 0.0
        %1145 = vadd.xlane.f32.xlu0 %v1144
        %v1146 = vpop.xlane.xlu0 %1145
        %v1147 = vsel %vm401, %v1143, 0.0
        %1148 = vadd.xlane.f32.xlu0 %v1147
        %v1149 = vpop.xlane.xlu0 %1148
        %v1150 = vrcp.pop %v1146
        %v1151 = vrcp.pop %v1149
        %v1152 = vmul.f32 %v1141, %v1150
        %v1153 = vmul.f32 %v1143, %v1151
        %v1154 = vpack.c.bf16 %v1153, %v1152
        %1155 = vrot.lane.b32.xlu0 %v349, 80
        %v1156 = vpop.permute.xlu0 %1155
        %v1159 = vsel %vm401, %v1154, 0
        %1161 = vmatprep.subr.bf16.mxu0 0
        %1162 = vmatpush1.bf16.msra.mxu0 %v1156
        %1163 = vmatprep.subr.bf16.mxu0 0
        %1164 = vmatpush1.bf16.msra.mxu0 0
        %1165 = vmatprep.subr.bf16.mxu0 0
        %1166 = vmatpush1.bf16.msra.mxu0 0
        %1167 = vmatprep.subr.bf16.mxu0 0
        %1168 = vmatpush1.bf16.msra.mxu0 0
        %1169 = vmatprep.subr.bf16.mxu0 0
        %1170 = vmatpush1.bf16.msra.mxu0 0
        %1171 = vmatprep.subr.bf16.mxu0 0
        %1172 = vmatpush1.bf16.msra.mxu0 0
        %1173 = vmatprep.subr.bf16.mxu0 0
        %1174 = vmatpush1.bf16.msra.mxu0 0
        %1175 = vmatprep.subr.bf16.mxu0 0
        %1176 = vmatpush1.bf16.msra.mxu0 0
        %1177 = vmatprep.subr.bf16.mxu0 0
        %1178 = vmatpush1.bf16.msra.mxu0 0
        %1179 = vmatprep.subr.bf16.mxu0 0
        %1180 = vmatpush1.bf16.msra.mxu0 0
        %1181 = vmatprep.subr.bf16.mxu0 0
        %1182 = vmatpush1.bf16.msra.mxu0 0
        %1183 = vmatprep.subr.bf16.mxu0 0
        %1184 = vmatpush1.bf16.msra.mxu0 0
        %1185 = vmatprep.subr.bf16.mxu0 0
        %1186 = vmatpush1.bf16.msra.mxu0 0
        %1187 = vmatprep.subr.bf16.mxu0 0
        %1188 = vmatpush1.bf16.msra.mxu0 0
        %1189 = vmatprep.subr.bf16.mxu0 0
        %1190 = vmatpush1.bf16.msra.mxu0 0
        %1191 = vmatprep.subr.bf16.mxu0 0
        %1192 = vmatpush1.bf16.msra.mxu0 0
        %1193 = vmatprep.mubr.bf16.mxu0 0
        %1194 = vmatmul.mubr.bf16.gmra.mrb[0].mxu0 %v1159
        %v1195 = vpop.f32.mrb[0].mxu0
        %v1196 = vadd.f32 0.0, %v1195
        %v1197 = vpop.f32.mrb[0].mxu0
        %v1198 = vpop.f32.mrb[0].mxu0
        %v1199 = vadd.f32 0.0, %v1198
        %v1200 = vpop.f32.mrb[0].mxu0
        %1201 = vdwg.mxu0
        %v1202 = vpack.c.bf16 %v1199, %v1196
        %1203 = vrot.lane.b32.xlu0 %v348, 72
        %v1204 = vpop.permute.xlu0 %1203
        %1205 = vrot.lane.b32.xlu0 %v348, 8
        %v1206 = vpop.permute.xlu0 %1205
        %v1208 = vsel %vm353, %v1204, 0
        %v1211 = vsel %vm353, %v1206, 0
        %1213 = vmatprep.subr.bf16.mxu0 0
        %1214 = vmatpush1.bf16.xpose.msra.mxu0 %v1211
        %1215 = vmatprep.subr.bf16.mxu0 0
        %1216 = vmatpush1.bf16.xpose.msra.mxu0 0
        %1217 = vmatprep.subr.bf16.mxu0 0
        %1218 = vmatpush1.bf16.xpose.msra.mxu0 0
        %1219 = vmatprep.subr.bf16.mxu0 0
        %1220 = vmatpush1.bf16.xpose.msra.mxu0 0
        %1221 = vmatprep.subr.bf16.mxu0 0
        %1222 = vmatpush1.bf16.xpose.msra.mxu0 0
        %1223 = vmatprep.subr.bf16.mxu0 0
        %1224 = vmatpush1.bf16.xpose.msra.mxu0 0
        %1225 = vmatprep.subr.bf16.mxu0 0
        %1226 = vmatpush1.bf16.xpose.msra.mxu0 0
        %1227 = vmatprep.subr.bf16.mxu0 0
        %1228 = vmatpush1.bf16.xpose.msra.mxu0 0
        %1229 = vmatprep.subr.bf16.mxu0 0
        %1230 = vmatpush1.bf16.xpose.msra.mxu0 0
        %1231 = vmatprep.subr.bf16.mxu0 0
        %1232 = vmatpush1.bf16.xpose.msra.mxu0 0
        %1233 = vmatprep.subr.bf16.mxu0 0
        %1234 = vmatpush1.bf16.xpose.msra.mxu0 0
        %1235 = vmatprep.subr.bf16.mxu0 0
        %1236 = vmatpush1.bf16.xpose.msra.mxu0 0
        %1237 = vmatprep.subr.bf16.mxu0 0
        %1238 = vmatpush1.bf16.xpose.msra.mxu0 0
        %1239 = vmatprep.subr.bf16.mxu0 0
        %1240 = vmatpush1.bf16.xpose.msra.mxu0 0
        %1241 = vmatprep.subr.bf16.mxu0 0
        %1242 = vmatpush1.bf16.xpose.msra.mxu0 0
        %1243 = vmatprep.subr.bf16.mxu0 0
        %1244 = vmatpush1.bf16.xpose.msra.mxu0 0
        %1245 = vmatprep.mubr.bf16.mxu0 0
        %1246 = vmatmul.mubr.bf16.gmra.mrb[0].mxu0 %v1208
        %v1247 = vpop.f32.mrb[0].mxu0
        %v1248 = vadd.f32 0.0, %v1247
        %v1249 = vpop.f32.mrb[0].mxu0
        %v1250 = vpop.f32.mrb[0].mxu0
        %v1251 = vadd.f32 0.0, %v1250
        %v1252 = vpop.f32.mrb[0].mxu0
        %1253 = vdwg.mxu0
        %v1254 = vsel %vm401, %v1248, -inf
        %1255 = vmax.xlane.f32.xlu0 %v1254
        %v1256 = vpop.xlane.xlu0 %1255
        %v1257 = vsel %vm401, %v1251, -inf
        %1258 = vmax.xlane.f32.xlu0 %v1257
        %v1259 = vpop.xlane.xlu0 %1258
        %v1260 = vsub.f32 %v1248, %v1256
        %v1261 = vsub.f32 %v1251, %v1259
        %v1262 = vmul.f32 %v1260, 1.442695
        %v1263 = vpow.pop %v1262
        %v1264 = vmul.f32 %v1261, 1.442695
        %v1265 = vpow.pop %v1264
        %v1266 = vsel %vm401, %v1263, 0.0
        %1267 = vadd.xlane.f32.xlu0 %v1266
        %v1268 = vpop.xlane.xlu0 %1267
        %v1269 = vsel %vm401, %v1265, 0.0
        %1270 = vadd.xlane.f32.xlu0 %v1269
        %v1271 = vpop.xlane.xlu0 %1270
        %v1272 = vrcp.pop %v1268
        %v1273 = vrcp.pop %v1271
        %v1274 = vmul.f32 %v1263, %v1272
        %v1275 = vmul.f32 %v1265, %v1273
        %v1276 = vpack.c.bf16 %v1275, %v1274
        %1277 = vrot.lane.b32.xlu0 %v349, 72
        %v1278 = vpop.permute.xlu0 %1277
        %v1281 = vsel %vm401, %v1276, 0
        %1283 = vmatprep.subr.bf16.mxu0 0
        %1284 = vmatpush1.bf16.msra.mxu0 %v1278
        %1285 = vmatprep.subr.bf16.mxu0 0
        %1286 = vmatpush1.bf16.msra.mxu0 0
        %1287 = vmatprep.subr.bf16.mxu0 0
        %1288 = vmatpush1.bf16.msra.mxu0 0
        %1289 = vmatprep.subr.bf16.mxu0 0
        %1290 = vmatpush1.bf16.msra.mxu0 0
        %1291 = vmatprep.subr.bf16.mxu0 0
        %1292 = vmatpush1.bf16.msra.mxu0 0
        %1293 = vmatprep.subr.bf16.mxu0 0
        %1294 = vmatpush1.bf16.msra.mxu0 0
        %1295 = vmatprep.subr.bf16.mxu0 0
        %1296 = vmatpush1.bf16.msra.mxu0 0
        %1297 = vmatprep.subr.bf16.mxu0 0
        %1298 = vmatpush1.bf16.msra.mxu0 0
        %1299 = vmatprep.subr.bf16.mxu0 0
        %1300 = vmatpush1.bf16.msra.mxu0 0
        %1301 = vmatprep.subr.bf16.mxu0 0
        %1302 = vmatpush1.bf16.msra.mxu0 0
        %1303 = vmatprep.subr.bf16.mxu0 0
        %1304 = vmatpush1.bf16.msra.mxu0 0
        %1305 = vmatprep.subr.bf16.mxu0 0
        %1306 = vmatpush1.bf16.msra.mxu0 0
        %1307 = vmatprep.subr.bf16.mxu0 0
        %1308 = vmatpush1.bf16.msra.mxu0 0
        %1309 = vmatprep.subr.bf16.mxu0 0
        %1310 = vmatpush1.bf16.msra.mxu0 0
        %1311 = vmatprep.subr.bf16.mxu0 0
        %1312 = vmatpush1.bf16.msra.mxu0 0
        %1313 = vmatprep.subr.bf16.mxu0 0
        %1314 = vmatpush1.bf16.msra.mxu0 0
        %1315 = vmatprep.mubr.bf16.mxu0 0
        %1316 = vmatmul.mubr.bf16.gmra.mrb[0].mxu0 %v1281
        %v1317 = vpop.f32.mrb[0].mxu0
        %v1318 = vadd.f32 0.0, %v1317
        %v1319 = vpop.f32.mrb[0].mxu0
        %v1320 = vpop.f32.mrb[0].mxu0
        %v1321 = vadd.f32 0.0, %v1320
        %v1322 = vpop.f32.mrb[0].mxu0
        %1323 = vdwg.mxu0
        %v1324 = vpack.c.bf16 %v1321, %v1318
        %1326 = vrot.lane.b32.xlu0 %v592, 8
        %v1327 = vpop.permute.xlu0 %1326
        %1329 = vrot.lane.b32.xlu0 %v714, 16
        %v1330 = vpop.permute.xlu0 %1329
        %1332 = vrot.lane.b32.xlu0 %v836, 24
        %v1333 = vpop.permute.xlu0 %1332
        %1335 = vrot.lane.b32.xlu0 %v958, 32
        %v1336 = vpop.permute.xlu0 %1335
        %1338 = vrot.lane.b32.xlu0 %v1080, 40
        %v1339 = vpop.permute.xlu0 %1338
        %1341 = vrot.lane.b32.xlu0 %v1202, 48
        %v1342 = vpop.permute.xlu0 %1341
        %1344 = vrot.lane.b32.xlu0 %v1324, 56
        %v1345 = vpop.permute.xlu0 %1344
        %v1348 = vsel %vm353, %v469, %v1327
        %v1350 = vsel %vm401, %v1348, %v1330
        %vm1351 = vcmask 195584
        %v1353 = vsel %vm1351, %v1350, %v1333
        %vm1354 = vcmask 261120
        %v1356 = vsel %vm1354, %v1353, %v1336
        %vm1357 = vcmask 326656
        %v1359 = vsel %vm1357, %v1356, %v1339
        %vm1360 = vcmask 392192
        %v1362 = vsel %vm1360, %v1359, %v1342
        %vm1363 = vcmask 457728
        %v1365 = vsel %vm1363, %v1362, %v1345
        %v1366 = vld [vmem:[#allocation7] sm:$0xf]
        %v1367 = vld [vmem:[#allocation7 + $0x4] sm:$0xf]
        %v1368 = vld [vmem:[#allocation7 + $0x8] sm:$0xf]
        %v1369 = vld [vmem:[#allocation7 + $0xc] sm:$0xf]
        %v1370 = vld [vmem:[#allocation7 + $0x10] sm:$0xf]
        %v1371 = vld [vmem:[#allocation7 + $0x14] sm:$0xf]
        %v1372 = vld [vmem:[#allocation7 + $0x18] sm:$0xf]
        %v1373 = vld [vmem:[#allocation7 + $0x1c] sm:$0xf]
        %v1374 = vld [vmem:[%s3] sm:$0x1]
        %v1376 = vlaneseq
        %v1377 = vshrl.u32 %v1376, 7
        %v1378 = vsub.s32 0, %v1377
        %v1379 = vrot.slane %v1374, %v1378
        %v1389 = vunpack.c.l.b16 %v1366
        %v1390 = vunpack.c.l.b16 %v1367
        %v1391 = vunpack.c.l.b16 %v1368
        %v1392 = vunpack.c.l.b16 %v1369
        %v1393 = vunpack.c.l.b16 %v1370
        %v1394 = vunpack.c.l.b16 %v1371
        %v1395 = vunpack.c.l.b16 %v1372
        %v1396 = vunpack.c.l.b16 %v1373
        %v1397 = vpack.c.b16 %v1390, %v1389
        %v1398 = vpack.c.b16 %v1392, %v1391
        %v1399 = vpack.c.b16 %v1394, %v1393
        %v1400 = vpack.c.b16 %v1396, %v1395
        %v1405 = vsel %vm301, %v1365, 0
        %1407 = vmatprep.subr.bf16.mxu0 0
        %1408 = vmatpush1.bf16.msra.mxu0 %v1397
        %1409 = vmatprep.subr.bf16.mxu0 0
        %1410 = vmatpush1.bf16.msra.mxu0 %v1398
        %1411 = vmatprep.subr.bf16.mxu0 0
        %1412 = vmatpush1.bf16.msra.mxu0 %v1399
        %1413 = vmatprep.subr.bf16.mxu0 0
        %1414 = vmatpush1.bf16.msra.mxu0 %v1400
        %1415 = vmatprep.subr.bf16.mxu0 0
        %1416 = vmatpush1.bf16.msra.mxu0 0
        %1417 = vmatprep.subr.bf16.mxu0 0
        %1418 = vmatpush1.bf16.msra.mxu0 0
        %1419 = vmatprep.subr.bf16.mxu0 0
        %1420 = vmatpush1.bf16.msra.mxu0 0
        %1421 = vmatprep.subr.bf16.mxu0 0
        %1422 = vmatpush1.bf16.msra.mxu0 0
        %1423 = vmatprep.subr.bf16.mxu0 0
        %1424 = vmatpush1.bf16.msra.mxu0 0
        %1425 = vmatprep.subr.bf16.mxu0 0
        %1426 = vmatpush1.bf16.msra.mxu0 0
        %1427 = vmatprep.subr.bf16.mxu0 0
        %1428 = vmatpush1.bf16.msra.mxu0 0
        %1429 = vmatprep.subr.bf16.mxu0 0
        %1430 = vmatpush1.bf16.msra.mxu0 0
        %1431 = vmatprep.subr.bf16.mxu0 0
        %1432 = vmatpush1.bf16.msra.mxu0 0
        %1433 = vmatprep.subr.bf16.mxu0 0
        %1434 = vmatpush1.bf16.msra.mxu0 0
        %1435 = vmatprep.subr.bf16.mxu0 0
        %1436 = vmatpush1.bf16.msra.mxu0 0
        %1437 = vmatprep.subr.bf16.mxu0 0
        %1438 = vmatpush1.bf16.msra.mxu0 0
        %1439 = vmatprep.mubr.bf16.mxu0 0
        %1440 = vmatmul.mubr.bf16.gmra.mrb[0].mxu0 %v1405
        %v1441 = vpop.f32.mrb[0].mxu0
        %v1442 = vadd.f32 %v1379, %v1441
        %v1443 = vpop.f32.mrb[0].mxu0
        %v1444 = vpop.f32.mrb[0].mxu0
        %v1445 = vadd.f32 %v1379, %v1444
        %v1446 = vpop.f32.mrb[0].mxu0
        %1447 = vdwg.mxu0
        %1448 = vst [vmem:[%s244] sm:$0xff] %v1442
        %1449 = vst [vmem:[%s244 + $0x8] sm:$0xff] %v1445
        %s1450 = sand.u32 %s119, 1
        %s1451 = scalar_lea.sflag [#allocation4], %s1450
        %s1452 = sand.u32 %s119, 1
        %s1453 = smul.addr %s1452, 16
        %s1454 = scalar_lea.vmem [#allocation8], %s1453
        // Predicated region
        $region49: #{tpu_custom_call.1} parent=35 // pred_check
          %p1455 = pneg %p129
        $region50: #{tpu_custom_call.1} parent=35 // pred_check_branch
          %1457 = sbr.rel (%p1455) target = $region52
        $region51: #{tpu_custom_call.1} parent=35 // pred_region
          %s1459 = ssub.s32 256, 256
          %1460 = vsyncadd %s1451, %s1459
          %s1461 = smul.addr %s22, 2
          %s1462 = smul.addr %s1461, 128
          %s1463 = scalar_lea.hbm %s4, %s1462
          %s1464 = sshll.u32 %s1454, 4
          %s1465 = int_to_ptr.vmem [resolvable:$true] %s1464
          %1470 = dma.vmem_to_hbm [thread:$0]  %s1465, 256, %s1463, %s1451, 128, 128, 8
        $region52: #{tpu_custom_call.1} parent=35 // pred_fallthru
          _
      $region36: #{tpu_custom_call.1} parent=5 // pred_fallthru
        _
      %p1471 = scmp.le.s32.totalorder 2, %s17
      // Predicated region
      $region53: #{tpu_custom_call.1} parent=5 // pred_check
        %p1472 = pneg %p1471
      $region54: #{tpu_custom_call.1} parent=5 // pred_check_branch
        %1474 = sbr.rel (%p1472) target = $region56
      $region55: #{tpu_custom_call.1} parent=5 // pred_region
        %s1475 = ssub.s32 %s17, 2
        // Predicated region
        $region57: #{tpu_custom_call.1} parent=55 // pred_check
          %p1476 = pneg %p135
        $region58: #{tpu_custom_call.1} parent=55 // pred_check_branch
          %1478 = sbr.rel (%p1476) target = $region60
        $region59: #{tpu_custom_call.1} parent=55 // pred_region
          %s1479 = sand.u32 %s120, 1
          %s1480 = scalar_lea.sflag [#allocation4], %s1479
          %s1481 = sand.u32 %s120, 1
          %s1482 = smul.addr %s1481, 16
          %s1483 = scalar_lea.vmem [#allocation8], %s1482
          %1484 = dma.done %s1480, 256
        $region60: #{tpu_custom_call.1} parent=55 // pred_fallthru
          _
      $region56: #{tpu_custom_call.1} parent=5 // pred_fallthru
        _
    $region6: #{tpu_custom_call.1} parent=1 // loop_footer
      %s21 = sadd.s32 1, %s17
    $region7: #{tpu_custom_call.1} parent=1 // loop_footer_branch
      %16 = sbr.rel target = $region3
    $region8: #{tpu_custom_call.1} parent=1 // loop_exit
      _
    %1485 = vsyncpa [#allocation3], 1
    %s1486 = scalar_lea.sflag [#allocation3], 1
    %1487 = vsyncpa %s1486, 1
    %1488 = vsyncpa [#allocation6], 1
    %1489 = vsyncpa [#allocation4], 1
    %s1490 = scalar_lea.sflag [#allocation4], 1
    %1491 = vsyncpa %s1490, 1

</llo_original>
